<compile_context>
chip_gen: v7x
topology: tpu7x:2x2x1
jax: 0.10.0
libtpu: 0.0.40
codegen_flags: <defaults>
</compile_context>

<pallas_src>
import functools
import math

import jax
import jax.numpy as jnp
import numpy as np
from jax import lax
from jax.experimental import pallas as pl
from jax.experimental.pallas import tpu as pltpu


# ----------------------------- kernel-side math -----------------------------

def _layer_norm(x, gamma, beta, eps=1e-6):
    d = x.shape[-1]
    mean = jnp.mean(x, axis=-1, keepdims=True)
    var = jnp.sum((x - mean) ** 2, axis=-1, keepdims=True) * (1.0 / (d - 1))
    # Exact reciprocal for LayerNorm: the whole activation is scaled by it.
    inv = pl.reciprocal(jnp.sqrt(var) + eps, approx=False)
    return gamma * (x - mean) * inv + beta


def encoder_layer_kernel(
    x_ref, bias_ref,
    ln1_g_ref, ln1_b_ref,
    wq_ref, bq_ref, wk_ref, bk_ref, wv_ref, bv_ref, wo_ref, bo_ref,
    ln2_g_ref, ln2_b_ref,
    w1_ref, b1_ref, w2_ref, b2_ref,
    o_ref,
    *, num_heads, d_k,
):
    bt, seq, d = x_ref.shape
    n = bt * seq
    mm = wq_ref.dtype                 # MXU input dtype (f32 or bf16)

    x = x_ref[...].reshape(n, d)      # (N, D) f32, N = rows in this block

    # ---- sublayer 0 :  x + SelfAttn(LayerNorm(x)) ---------------------------
    xn = _layer_norm(x, ln1_g_ref[...], ln1_b_ref[...])
    xn_mm = xn.astype(mm)
    # Full-width (K = D) projections; f32 accumulation on the MXU.
    # 1/sqrt(d_k) is already folded into Wq / bq in the wrapper.
    q = (jnp.dot(xn_mm, wq_ref[...], preferred_element_type=jnp.float32)
         + bq_ref[...]).astype(mm)
    k = (jnp.dot(xn_mm, wk_ref[...], preferred_element_type=jnp.float32)
         + bk_ref[...]).astype(mm)
    v = (jnp.dot(xn_mm, wv_ref[...], preferred_element_type=jnp.float32)
         + bv_ref[...]).astype(mm)

    # Additive mask bias broadcast once (not per head): (Bt, 1, S) -> (Bt, S, S).
    bias = jnp.broadcast_to(bias_ref[...].astype(jnp.float32), (bt, seq, seq))

    # Per-head attention, batched over the Bt rows with einsum; head outputs
    # stay in registers and are concatenated for one full-K Wo matmul.
    head_outs = []
    for h in range(num_heads):
        col = slice(h * d_k, (h + 1) * d_k)
        qh = q[:, col].reshape(bt, seq, d_k)
        kh = k[:, col].reshape(bt, seq, d_k)
        vh = v[:, col].reshape(bt, seq, d_k)
        scores = jnp.einsum("bqd,bkd->bqk", qh, kh,
                            preferred_element_type=jnp.float32) + bias
        m = jnp.max(scores, axis=-1, keepdims=True)
        p = jnp.exp(scores - m)
        p = p * pl.reciprocal(jnp.sum(p, axis=-1, keepdims=True),
                              approx=True)       # EUP slot; error is benign
        oh = jnp.einsum("bqk,bkd->bqd", p.astype(mm), vh,
                        preferred_element_type=jnp.float32)
        head_outs.append(oh.reshape(n, d_k))
    ctx = jnp.concatenate(head_outs, axis=-1)     # (N, D) f32, in registers

    # Single (N, D) @ (D, D) output projection.
    attn = jnp.dot(ctx.astype(mm), wo_ref[...],
                   preferred_element_type=jnp.float32) + bo_ref[...]
    x = x + attn

    # ---- sublayer 1 :  x + FFN(LayerNorm(x)) --------------------------------
    xn2 = _layer_norm(x, ln2_g_ref[...], ln2_b_ref[...])
    h1 = jnp.maximum(
        jnp.dot(xn2.astype(mm), w1_ref[...],
                preferred_element_type=jnp.float32) + b1_ref[...],
        0.0)
    ff = jnp.dot(h1.astype(mm), w2_ref[...],
                 preferred_element_type=jnp.float32) + b2_ref[...]
    o_ref[...] = (x + ff).reshape(bt, seq, d).astype(o_ref.dtype)


# -------------------------------- wrapper -----------------------------------

def encoder_layer(x, mask, params, *, num_heads,
                  matmul_dtype=jnp.float32, batch_block=None):
    """x: (B, S, D) f32; mask: (B, 1, S) int32 (nonzero = attend).

    matmul_dtype: dtype fed to the MXU.  bf16 is recommended on ALL TPU
    generations (the MXU is bf16-native, and it halves weight HBM/VMEM
    traffic); accumulation and all LayerNorm / softmax element-wise math
    stay f32 regardless.
    """
    B, S, D = x.shape
    assert D % num_heads == 0
    d_k = D // num_heads

    # Hoisted mask handling: additive f32 bias computed once outside the kernel.
    attn_bias = jnp.where(mask != 0, 0.0, -1e9).astype(jnp.float32)   # (B,1,S)

    (ln1_g, ln1_b, wq, bq, wk, bk, wv, bv, wo, bo,
     ln2_g, ln2_b, w1, b1, w2, b2) = params
    # Fold the 1/sqrt(d_k) query scale into Wq / bq (one-time wrapper op).
    scale = 1.0 / math.sqrt(d_k)
    wq = wq * scale
    bq = bq * scale
    # Cast the big projection / FFN weights for the MXU; biases & LN params f32.
    cast = lambda w: w.astype(matmul_dtype)
    params = (ln1_g, ln1_b, cast(wq), bq, cast(wk), bk, cast(wv), bv,
              cast(wo), bo, ln2_g, ln2_b, cast(w1), b1, cast(w2), b2)

    # Grid coarsening: target >= 256 rows (Bt*S) per step so the (N, D)
    # matmuls fill the MXU height, then take the largest divisor of B.
    # NOTE: for prime/odd B this can degrade toward Bt=1 (still correct).
    if batch_block is None:
        batch_block = max(1, min(B, pl.cdiv(256, max(S, 1))))
        while B % batch_block != 0:
            batch_block -= 1
    Bt = batch_block
    grid = (B // Bt,)

    def _full_spec(arr):
        nd = arr.ndim
        return pl.BlockSpec(arr.shape, lambda b, _nd=nd: (0,) * _nd)

    in_specs = [
        pl.BlockSpec((Bt, S, D), lambda b: (b, 0, 0)),   # x: Bt rows / step
        pl.BlockSpec((Bt, 1, S), lambda b: (b, 0, 0)),   # additive attn bias
    ] + [_full_spec(p) for p in params]                  # weights resident

    out_specs = pl.BlockSpec((Bt, S, D), lambda b: (b, 0, 0))

    # VMEM budget: resident weights (double-buffered by the default pipeline)
    # + double-buffered activation blocks + headroom.  Capped at 64 MiB so the
    # same limit is safe on v7x (64 MiB physical); raise toward ~100 MiB on
    # v5e/v6e (128 MiB physical) if bigger blocks/weights demand it.
    resident = sum(int(np.prod(p.shape)) * p.dtype.itemsize for p in params)
    block_bytes = Bt * S * D * 4 * 2 + Bt * S * 4        # x + out + bias blocks
    vmem_limit = 2 * resident + 4 * block_bytes + (8 << 20)
    vmem_limit = int(max(32 << 20, min(vmem_limit, 64 << 20)))

    kernel = functools.partial(encoder_layer_kernel,
                               num_heads=num_heads, d_k=d_k)

    return pl.pallas_call(
        kernel,
        out_shape=jax.ShapeDtypeStruct((B, S, D), jnp.float32),
        grid_spec=pltpu.PrefetchScalarGridSpec(
            num_scalar_prefetch=0,
            grid=grid,
            in_specs=in_specs,
            out_specs=out_specs,
        ),
        compiler_params=pltpu.CompilerParams(
            dimension_semantics=("parallel",),
            vmem_limit_bytes=vmem_limit,
        ),
    )(x, attn_bias, *params)


# --------------------------- pure-JAX reference ------------------------------

def encoder_layer_ref(x, mask, params, *, num_heads):
    (ln1_g, ln1_b, wq, bq, wk, bk, wv, bv, wo, bo,
     ln2_g, ln2_b, w1, b1, w2, b2) = params
    B, S, D = x.shape
    d_k = D // num_heads

    def ln(x, g, b, eps=1e-6):
        mean = jnp.mean(x, axis=-1, keepdims=True)
        var = jnp.sum((x - mean) ** 2, axis=-1, keepdims=True) / (D - 1)
        return g * (x - mean) / (jnp.sqrt(var) + eps) + b

    xn = ln(x, ln1_g, ln1_b)
    q = (xn @ wq + bq).reshape(B, S, num_heads, d_k).transpose(0, 2, 1, 3)
    k = (xn @ wk + bk).reshape(B, S, num_heads, d_k).transpose(0, 2, 1, 3)
    v = (xn @ wv + bv).reshape(B, S, num_heads, d_k).transpose(0, 2, 1, 3)
    scores = jnp.einsum("bhqd,bhkd->bhqk", q, k) / math.sqrt(d_k)
    scores = jnp.where(mask[:, None] != 0, scores, -1e9)
    p = jax.nn.softmax(scores, axis=-1)
    attn = jnp.einsum("bhqk,bhkd->bhqd", p, v).transpose(0, 2, 1, 3).reshape(B, S, D)
    x = x + (attn @ wo + bo)

    xn2 = ln(x, ln2_g, ln2_b)
    ff = jnp.maximum(xn2 @ w1 + b1, 0.0) @ w2 + b2
    return x + ff


# ----------------------------------- main ------------------------------------

if __name__ == "__main__":
    B, S, D, H, D_FF = 2, 8, 32, 4, 64

    key = jax.random.PRNGKey(0)
    ks = jax.random.split(key, 16)

    def w(k, shape, scale=0.1):
        return (scale * jax.random.normal(k, shape)).astype(jnp.float32)

    params = (
        jnp.ones((1, D), jnp.float32),   # ln1 gamma
        jnp.zeros((1, D), jnp.float32),  # ln1 beta
        w(ks[0], (D, D)), w(ks[1], (1, D), 0.01),   # Wq, bq
        w(ks[2], (D, D)), w(ks[3], (1, D), 0.01),   # Wk, bk
        w(ks[4], (D, D)), w(ks[5], (1, D), 0.01),   # Wv, bv
        w(ks[6], (D, D)), w(ks[7], (1, D), 0.01),   # Wo, bo
        jnp.ones((1, D), jnp.float32),   # ln2 gamma
        jnp.zeros((1, D), jnp.float32),  # ln2 beta
        w(ks[8], (D, D_FF)), w(ks[9], (1, D_FF), 0.01),   # W1, b1
        w(ks[10], (D_FF, D)), w(ks[11], (1, D), 0.01),    # W2, b2
    )

    x = jax.random.normal(ks[12], (B, S, D), dtype=jnp.float32)
    # mask: batch 0 attends everywhere; batch 1 masks out the last 2 key positions
    mask = np.ones((B, 1, S), dtype=np.int32)
    mask[1, 0, -2:] = 0
    mask = jnp.asarray(mask)

    ref = encoder_layer_ref(x, mask, params, num_heads=H)

    # f32 MXU path.  LayerNorm reciprocal is exact; only the softmax denom
    # uses the approximate EUP reciprocal, so tolerance can be tight.
    out_f32 = jax.block_until_ready(encoder_layer(x, mask, params, num_heads=H))
    np.testing.assert_allclose(np.asarray(out_f32), np.asarray(ref),
                               rtol=1e-2, atol=1e-2)

    # bf16 MXU path (recommended fast path on v5e/v6e/v7x): bf16 matmul inputs,
    # f32 accumulation, f32 LayerNorm / softmax.  Looser tolerance for bf16
    # input rounding.
    out_bf16 = jax.block_until_ready(
        encoder_layer(x, mask, params, num_heads=H, matmul_dtype=jnp.bfloat16))
    np.testing.assert_allclose(np.asarray(out_bf16), np.asarray(ref),
                               rtol=8e-2, atol=8e-2)

    print("KERNEL_OK")
</pallas_src>

<mosaic_0001>
module attributes {stable_mosaic.version = 11 : i64} {
  func.func @encoder_layer_kernel(%arg0: i32, %arg1: memref<2x8x32xf32, #tpu.memory_space<vmem>>, %arg2: memref<2x1x8xf32, #tpu.memory_space<vmem>>, %arg3: memref<1x32xf32, #tpu.memory_space<vmem>>, %arg4: memref<1x32xf32, #tpu.memory_space<vmem>>, %arg5: memref<32x32xf32, #tpu.memory_space<vmem>>, %arg6: memref<1x32xf32, #tpu.memory_space<vmem>>, %arg7: memref<32x32xf32, #tpu.memory_space<vmem>>, %arg8: memref<1x32xf32, #tpu.memory_space<vmem>>, %arg9: memref<32x32xf32, #tpu.memory_space<vmem>>, %arg10: memref<1x32xf32, #tpu.memory_space<vmem>>, %arg11: memref<32x32xf32, #tpu.memory_space<vmem>>, %arg12: memref<1x32xf32, #tpu.memory_space<vmem>>, %arg13: memref<1x32xf32, #tpu.memory_space<vmem>>, %arg14: memref<1x32xf32, #tpu.memory_space<vmem>>, %arg15: memref<32x64xf32, #tpu.memory_space<vmem>>, %arg16: memref<1x64xf32, #tpu.memory_space<vmem>>, %arg17: memref<64x32xf32, #tpu.memory_space<vmem>>, %arg18: memref<1x32xf32, #tpu.memory_space<vmem>>, %arg19: memref<2x8x32xf32, #tpu.memory_space<vmem>>) attributes {dimension_semantics = [#tpu.dimension_semantics<parallel>], iteration_bounds = array<i64: 1>, scalar_prefetch = 0 : i64, scratch_operands = 0 : i64, tpu.core_type = #tpu.core_type<tc>, window_params = [{transform_indices = @transform_0, window_bounds = array<i64: 2, 8, 32>}, {transform_indices = @transform_1, window_bounds = array<i64: 2, 1, 8>}, {pipeline_mode = #tpu.pipeline_mode<synchronous>, transform_indices = @transform_2, window_bounds = array<i64: 1, 32>}, {pipeline_mode = #tpu.pipeline_mode<synchronous>, transform_indices = @transform_3, window_bounds = array<i64: 1, 32>}, {pipeline_mode = #tpu.pipeline_mode<synchronous>, transform_indices = @transform_4, window_bounds = array<i64: 32, 32>}, {pipeline_mode = #tpu.pipeline_mode<synchronous>, transform_indices = @transform_5, window_bounds = array<i64: 1, 32>}, {pipeline_mode = #tpu.pipeline_mode<synchronous>, transform_indices = @transform_6, window_bounds = array<i64: 32, 32>}, {pipeline_mode = #tpu.pipeline_mode<synchronous>, transform_indices = @transform_7, window_bounds = array<i64: 1, 32>}, {pipeline_mode = #tpu.pipeline_mode<synchronous>, transform_indices = @transform_8, window_bounds = array<i64: 32, 32>}, {pipeline_mode = #tpu.pipeline_mode<synchronous>, transform_indices = @transform_9, window_bounds = array<i64: 1, 32>}, {pipeline_mode = #tpu.pipeline_mode<synchronous>, transform_indices = @transform_10, window_bounds = array<i64: 32, 32>}, {pipeline_mode = #tpu.pipeline_mode<synchronous>, transform_indices = @transform_11, window_bounds = array<i64: 1, 32>}, {pipeline_mode = #tpu.pipeline_mode<synchronous>, transform_indices = @transform_12, window_bounds = array<i64: 1, 32>}, {pipeline_mode = #tpu.pipeline_mode<synchronous>, transform_indices = @transform_13, window_bounds = array<i64: 1, 32>}, {pipeline_mode = #tpu.pipeline_mode<synchronous>, transform_indices = @transform_14, window_bounds = array<i64: 32, 64>}, {pipeline_mode = #tpu.pipeline_mode<synchronous>, transform_indices = @transform_15, window_bounds = array<i64: 1, 64>}, {pipeline_mode = #tpu.pipeline_mode<synchronous>, transform_indices = @transform_16, window_bounds = array<i64: 64, 32>}, {pipeline_mode = #tpu.pipeline_mode<synchronous>, transform_indices = @transform_17, window_bounds = array<i64: 1, 32>}, {transform_indices = @transform_18, window_bounds = array<i64: 2, 8, 32>}]} {
    %c0 = arith.constant 0 : index
    %c0_0 = arith.constant 0 : index
    %c0_1 = arith.constant 0 : index
    %0 = vector.load %arg1[%c0, %c0_0, %c0_1] : memref<2x8x32xf32, #tpu.memory_space<vmem>>, vector<2x8x32xf32>
    %1 = vector.shape_cast %0 : vector<2x8x32xf32> to vector<16x32xf32>
    %c0_2 = arith.constant 0 : index
    %c0_3 = arith.constant 0 : index
    %2 = vector.load %arg3[%c0_2, %c0_3] : memref<1x32xf32, #tpu.memory_space<vmem>>, vector<1x32xf32>
    %c0_4 = arith.constant 0 : index
    %c0_5 = arith.constant 0 : index
    %3 = vector.load %arg4[%c0_4, %c0_5] : memref<1x32xf32, #tpu.memory_space<vmem>>, vector<1x32xf32>
    %cst = arith.constant dense<0.000000e+00> : vector<16xf32>
    %4 = vector.multi_reduction <add>, %1, %cst [1] : vector<16x32xf32> to vector<16xf32>
    %5 = vector.shape_cast %4 : vector<16xf32> to vector<16x1xf32>
    %cst_6 = arith.constant 3.200000e+01 : f32
    %6 = vector.broadcast %cst_6 : f32 to vector<16x1xf32>
    %7 = arith.divf %5, %6 : vector<16x1xf32>
    %8 = vector.broadcast %7 : vector<16x1xf32> to vector<16x32xf32>
    %9 = arith.subf %1, %8 : vector<16x32xf32>
    %10 = arith.mulf %9, %9 : vector<16x32xf32>
    %cst_7 = arith.constant dense<0.000000e+00> : vector<16xf32>
    %11 = vector.multi_reduction <add>, %10, %cst_7 [1] : vector<16x32xf32> to vector<16xf32>
    %12 = vector.shape_cast %11 : vector<16xf32> to vector<16x1xf32>
    %cst_8 = arith.constant 0.0322580636 : f32
    %13 = vector.broadcast %cst_8 : f32 to vector<16x1xf32>
    %14 = arith.mulf %12, %13 : vector<16x1xf32>
    %15 = math.sqrt %14 : vector<16x1xf32>
    %cst_9 = arith.constant 9.99999997E-7 : f32
    %16 = vector.broadcast %cst_9 : f32 to vector<16x1xf32>
    %17 = arith.addf %15, %16 : vector<16x1xf32>
    %18 = tpu.reciprocal %17 : vector<16x1xf32> -> vector<16x1xf32>
    %19 = vector.broadcast %7 : vector<16x1xf32> to vector<16x32xf32>
    %20 = arith.subf %1, %19 : vector<16x32xf32>
    %21 = vector.broadcast %2 : vector<1x32xf32> to vector<16x32xf32>
    %22 = arith.mulf %21, %20 : vector<16x32xf32>
    %23 = vector.broadcast %18 : vector<16x1xf32> to vector<16x32xf32>
    %24 = arith.mulf %22, %23 : vector<16x32xf32>
    %25 = vector.broadcast %3 : vector<1x32xf32> to vector<16x32xf32>
    %26 = arith.addf %24, %25 : vector<16x32xf32>
    %c0_10 = arith.constant 0 : index
    %c0_11 = arith.constant 0 : index
    %27 = vector.load %arg5[%c0_10, %c0_11] : memref<32x32xf32, #tpu.memory_space<vmem>>, vector<32x32xf32>
    %cst_12 = arith.constant dense<0.000000e+00> : vector<16x32xf32>
    %28 = tpu.matmul %26, %27, %cst_12 {dimension_numbers = #tpu.dot_dimension_numbers<[1], [0], [0], [1], [0, 0, 1, 1], [], []>} : vector<16x32xf32>, vector<32x32xf32>, vector<16x32xf32> -> vector<16x32xf32>
    %c0_13 = arith.constant 0 : index
    %c0_14 = arith.constant 0 : index
    %29 = vector.load %arg6[%c0_13, %c0_14] : memref<1x32xf32, #tpu.memory_space<vmem>>, vector<1x32xf32>
    %30 = vector.broadcast %29 : vector<1x32xf32> to vector<16x32xf32>
    %31 = arith.addf %28, %30 : vector<16x32xf32>
    %c0_15 = arith.constant 0 : index
    %c0_16 = arith.constant 0 : index
    %32 = vector.load %arg7[%c0_15, %c0_16] : memref<32x32xf32, #tpu.memory_space<vmem>>, vector<32x32xf32>
    %cst_17 = arith.constant dense<0.000000e+00> : vector<16x32xf32>
    %33 = tpu.matmul %26, %32, %cst_17 {dimension_numbers = #tpu.dot_dimension_numbers<[1], [0], [0], [1], [0, 0, 1, 1], [], []>} : vector<16x32xf32>, vector<32x32xf32>, vector<16x32xf32> -> vector<16x32xf32>
    %c0_18 = arith.constant 0 : index
    %c0_19 = arith.constant 0 : index
    %34 = vector.load %arg8[%c0_18, %c0_19] : memref<1x32xf32, #tpu.memory_space<vmem>>, vector<1x32xf32>
    %35 = vector.broadcast %34 : vector<1x32xf32> to vector<16x32xf32>
    %36 = arith.addf %33, %35 : vector<16x32xf32>
    %c0_20 = arith.constant 0 : index
    %c0_21 = arith.constant 0 : index
    %37 = vector.load %arg9[%c0_20, %c0_21] : memref<32x32xf32, #tpu.memory_space<vmem>>, vector<32x32xf32>
    %cst_22 = arith.constant dense<0.000000e+00> : vector<16x32xf32>
    %38 = tpu.matmul %26, %37, %cst_22 {dimension_numbers = #tpu.dot_dimension_numbers<[1], [0], [0], [1], [0, 0, 1, 1], [], []>} : vector<16x32xf32>, vector<32x32xf32>, vector<16x32xf32> -> vector<16x32xf32>
    %c0_23 = arith.constant 0 : index
    %c0_24 = arith.constant 0 : index
    %39 = vector.load %arg10[%c0_23, %c0_24] : memref<1x32xf32, #tpu.memory_space<vmem>>, vector<1x32xf32>
    %40 = vector.broadcast %39 : vector<1x32xf32> to vector<16x32xf32>
    %41 = arith.addf %38, %40 : vector<16x32xf32>
    %c0_25 = arith.constant 0 : index
    %c0_26 = arith.constant 0 : index
    %c0_27 = arith.constant 0 : index
    %42 = vector.load %arg2[%c0_25, %c0_26, %c0_27] : memref<2x1x8xf32, #tpu.memory_space<vmem>>, vector<2x1x8xf32>
    %43 = vector.shape_cast %42 : vector<2x1x8xf32> to vector<2x1x8xf32>
    %44 = vector.broadcast %43 : vector<2x1x8xf32> to vector<2x8x8xf32>
    %45 = vector.extract_strided_slice %31 {offsets = [0, 0], sizes = [16, 8], strides = [1, 1]} : vector<16x32xf32> to vector<16x8xf32>
    %46 = vector.shape_cast %45 : vector<16x8xf32> to vector<2x8x8xf32>
    %47 = vector.extract_strided_slice %36 {offsets = [0, 0], sizes = [16, 8], strides = [1, 1]} : vector<16x32xf32> to vector<16x8xf32>
    %48 = vector.shape_cast %47 : vector<16x8xf32> to vector<2x8x8xf32>
    %49 = vector.extract_strided_slice %41 {offsets = [0, 0], sizes = [16, 8], strides = [1, 1]} : vector<16x32xf32> to vector<16x8xf32>
    %50 = vector.shape_cast %49 : vector<16x8xf32> to vector<2x8x8xf32>
    "tpu.trace_start"() <{level = 10 : i32, message = "bqd,bkd->bqk"}> : () -> ()
    %cst_28 = arith.constant dense<0.000000e+00> : vector<2x8x8xf32>
    %51 = tpu.matmul %46, %48, %cst_28 {dimension_numbers = #tpu.dot_dimension_numbers<[2], [2], [1], [1], [0, 0, 0, 1, 1, 1], [0], [0]>} : vector<2x8x8xf32>, vector<2x8x8xf32>, vector<2x8x8xf32> -> vector<2x8x8xf32>
    "tpu.trace_stop"() : () -> ()
    %52 = arith.addf %51, %44 : vector<2x8x8xf32>
    %cst_29 = arith.constant dense<0xFF800000> : vector<2x8xf32>
    %53 = vector.multi_reduction <maximumf>, %52, %cst_29 [2] : vector<2x8x8xf32> to vector<2x8xf32>
    %54 = vector.shape_cast %53 : vector<2x8xf32> to vector<2x8x1xf32>
    %55 = vector.broadcast %54 : vector<2x8x1xf32> to vector<2x8x8xf32>
    %56 = arith.subf %52, %55 : vector<2x8x8xf32>
    %57 = math.exp %56 : vector<2x8x8xf32>
    %cst_30 = arith.constant dense<0.000000e+00> : vector<2x8xf32>
    %58 = vector.multi_reduction <add>, %57, %cst_30 [2] : vector<2x8x8xf32> to vector<2x8xf32>
    %59 = vector.shape_cast %58 : vector<2x8xf32> to vector<2x8x1xf32>
    %60 = tpu.reciprocal %59 {approx = true} : vector<2x8x1xf32> -> vector<2x8x1xf32>
    %61 = vector.broadcast %60 : vector<2x8x1xf32> to vector<2x8x8xf32>
    %62 = arith.mulf %57, %61 : vector<2x8x8xf32>
    "tpu.trace_start"() <{level = 10 : i32, message = "bqk,bkd->bqd"}> : () -> ()
    %cst_31 = arith.constant dense<0.000000e+00> : vector<2x8x8xf32>
    %63 = tpu.matmul %62, %50, %cst_31 {dimension_numbers = #tpu.dot_dimension_numbers<[2], [1], [1], [2], [0, 0, 0, 1, 1, 2], [0], [0]>} : vector<2x8x8xf32>, vector<2x8x8xf32>, vector<2x8x8xf32> -> vector<2x8x8xf32>
    "tpu.trace_stop"() : () -> ()
    %64 = vector.shape_cast %63 : vector<2x8x8xf32> to vector<16x8xf32>
    %65 = vector.extract_strided_slice %31 {offsets = [0, 8], sizes = [16, 8], strides = [1, 1]} : vector<16x32xf32> to vector<16x8xf32>
    %66 = vector.shape_cast %65 : vector<16x8xf32> to vector<2x8x8xf32>
    %67 = vector.extract_strided_slice %36 {offsets = [0, 8], sizes = [16, 8], strides = [1, 1]} : vector<16x32xf32> to vector<16x8xf32>
    %68 = vector.shape_cast %67 : vector<16x8xf32> to vector<2x8x8xf32>
    %69 = vector.extract_strided_slice %41 {offsets = [0, 8], sizes = [16, 8], strides = [1, 1]} : vector<16x32xf32> to vector<16x8xf32>
    %70 = vector.shape_cast %69 : vector<16x8xf32> to vector<2x8x8xf32>
    "tpu.trace_start"() <{level = 10 : i32, message = "bqd,bkd->bqk"}> : () -> ()
    %cst_32 = arith.constant dense<0.000000e+00> : vector<2x8x8xf32>
    %71 = tpu.matmul %66, %68, %cst_32 {dimension_numbers = #tpu.dot_dimension_numbers<[2], [2], [1], [1], [0, 0, 0, 1, 1, 1], [0], [0]>} : vector<2x8x8xf32>, vector<2x8x8xf32>, vector<2x8x8xf32> -> vector<2x8x8xf32>
    "tpu.trace_stop"() : () -> ()
    %72 = arith.addf %71, %44 : vector<2x8x8xf32>
    %cst_33 = arith.constant dense<0xFF800000> : vector<2x8xf32>
    %73 = vector.multi_reduction <maximumf>, %72, %cst_33 [2] : vector<2x8x8xf32> to vector<2x8xf32>
    %74 = vector.shape_cast %73 : vector<2x8xf32> to vector<2x8x1xf32>
    %75 = vector.broadcast %74 : vector<2x8x1xf32> to vector<2x8x8xf32>
    %76 = arith.subf %72, %75 : vector<2x8x8xf32>
    %77 = math.exp %76 : vector<2x8x8xf32>
    %cst_34 = arith.constant dense<0.000000e+00> : vector<2x8xf32>
    %78 = vector.multi_reduction <add>, %77, %cst_34 [2] : vector<2x8x8xf32> to vector<2x8xf32>
    %79 = vector.shape_cast %78 : vector<2x8xf32> to vector<2x8x1xf32>
    %80 = tpu.reciprocal %79 {approx = true} : vector<2x8x1xf32> -> vector<2x8x1xf32>
    %81 = vector.broadcast %80 : vector<2x8x1xf32> to vector<2x8x8xf32>
    %82 = arith.mulf %77, %81 : vector<2x8x8xf32>
    "tpu.trace_start"() <{level = 10 : i32, message = "bqk,bkd->bqd"}> : () -> ()
    %cst_35 = arith.constant dense<0.000000e+00> : vector<2x8x8xf32>
    %83 = tpu.matmul %82, %70, %cst_35 {dimension_numbers = #tpu.dot_dimension_numbers<[2], [1], [1], [2], [0, 0, 0, 1, 1, 2], [0], [0]>} : vector<2x8x8xf32>, vector<2x8x8xf32>, vector<2x8x8xf32> -> vector<2x8x8xf32>
    "tpu.trace_stop"() : () -> ()
    %84 = vector.shape_cast %83 : vector<2x8x8xf32> to vector<16x8xf32>
    %85 = vector.extract_strided_slice %31 {offsets = [0, 16], sizes = [16, 8], strides = [1, 1]} : vector<16x32xf32> to vector<16x8xf32>
    %86 = vector.shape_cast %85 : vector<16x8xf32> to vector<2x8x8xf32>
    %87 = vector.extract_strided_slice %36 {offsets = [0, 16], sizes = [16, 8], strides = [1, 1]} : vector<16x32xf32> to vector<16x8xf32>
    %88 = vector.shape_cast %87 : vector<16x8xf32> to vector<2x8x8xf32>
    %89 = vector.extract_strided_slice %41 {offsets = [0, 16], sizes = [16, 8], strides = [1, 1]} : vector<16x32xf32> to vector<16x8xf32>
    %90 = vector.shape_cast %89 : vector<16x8xf32> to vector<2x8x8xf32>
    "tpu.trace_start"() <{level = 10 : i32, message = "bqd,bkd->bqk"}> : () -> ()
    %cst_36 = arith.constant dense<0.000000e+00> : vector<2x8x8xf32>
    %91 = tpu.matmul %86, %88, %cst_36 {dimension_numbers = #tpu.dot_dimension_numbers<[2], [2], [1], [1], [0, 0, 0, 1, 1, 1], [0], [0]>} : vector<2x8x8xf32>, vector<2x8x8xf32>, vector<2x8x8xf32> -> vector<2x8x8xf32>
    "tpu.trace_stop"() : () -> ()
    %92 = arith.addf %91, %44 : vector<2x8x8xf32>
    %cst_37 = arith.constant dense<0xFF800000> : vector<2x8xf32>
    %93 = vector.multi_reduction <maximumf>, %92, %cst_37 [2] : vector<2x8x8xf32> to vector<2x8xf32>
    %94 = vector.shape_cast %93 : vector<2x8xf32> to vector<2x8x1xf32>
    %95 = vector.broadcast %94 : vector<2x8x1xf32> to vector<2x8x8xf32>
    %96 = arith.subf %92, %95 : vector<2x8x8xf32>
    %97 = math.exp %96 : vector<2x8x8xf32>
    %cst_38 = arith.constant dense<0.000000e+00> : vector<2x8xf32>
    %98 = vector.multi_reduction <add>, %97, %cst_38 [2] : vector<2x8x8xf32> to vector<2x8xf32>
    %99 = vector.shape_cast %98 : vector<2x8xf32> to vector<2x8x1xf32>
    %100 = tpu.reciprocal %99 {approx = true} : vector<2x8x1xf32> -> vector<2x8x1xf32>
    %101 = vector.broadcast %100 : vector<2x8x1xf32> to vector<2x8x8xf32>
    %102 = arith.mulf %97, %101 : vector<2x8x8xf32>
    "tpu.trace_start"() <{level = 10 : i32, message = "bqk,bkd->bqd"}> : () -> ()
    %cst_39 = arith.constant dense<0.000000e+00> : vector<2x8x8xf32>
    %103 = tpu.matmul %102, %90, %cst_39 {dimension_numbers = #tpu.dot_dimension_numbers<[2], [1], [1], [2], [0, 0, 0, 1, 1, 2], [0], [0]>} : vector<2x8x8xf32>, vector<2x8x8xf32>, vector<2x8x8xf32> -> vector<2x8x8xf32>
    "tpu.trace_stop"() : () -> ()
    %104 = vector.shape_cast %103 : vector<2x8x8xf32> to vector<16x8xf32>
    %105 = vector.extract_strided_slice %31 {offsets = [0, 24], sizes = [16, 8], strides = [1, 1]} : vector<16x32xf32> to vector<16x8xf32>
    %106 = vector.shape_cast %105 : vector<16x8xf32> to vector<2x8x8xf32>
    %107 = vector.extract_strided_slice %36 {offsets = [0, 24], sizes = [16, 8], strides = [1, 1]} : vector<16x32xf32> to vector<16x8xf32>
    %108 = vector.shape_cast %107 : vector<16x8xf32> to vector<2x8x8xf32>
    %109 = vector.extract_strided_slice %41 {offsets = [0, 24], sizes = [16, 8], strides = [1, 1]} : vector<16x32xf32> to vector<16x8xf32>
    %110 = vector.shape_cast %109 : vector<16x8xf32> to vector<2x8x8xf32>
    "tpu.trace_start"() <{level = 10 : i32, message = "bqd,bkd->bqk"}> : () -> ()
    %cst_40 = arith.constant dense<0.000000e+00> : vector<2x8x8xf32>
    %111 = tpu.matmul %106, %108, %cst_40 {dimension_numbers = #tpu.dot_dimension_numbers<[2], [2], [1], [1], [0, 0, 0, 1, 1, 1], [0], [0]>} : vector<2x8x8xf32>, vector<2x8x8xf32>, vector<2x8x8xf32> -> vector<2x8x8xf32>
    "tpu.trace_stop"() : () -> ()
    %112 = arith.addf %111, %44 : vector<2x8x8xf32>
    %cst_41 = arith.constant dense<0xFF800000> : vector<2x8xf32>
    %113 = vector.multi_reduction <maximumf>, %112, %cst_41 [2] : vector<2x8x8xf32> to vector<2x8xf32>
    %114 = vector.shape_cast %113 : vector<2x8xf32> to vector<2x8x1xf32>
    %115 = vector.broadcast %114 : vector<2x8x1xf32> to vector<2x8x8xf32>
    %116 = arith.subf %112, %115 : vector<2x8x8xf32>
    %117 = math.exp %116 : vector<2x8x8xf32>
    %cst_42 = arith.constant dense<0.000000e+00> : vector<2x8xf32>
    %118 = vector.multi_reduction <add>, %117, %cst_42 [2] : vector<2x8x8xf32> to vector<2x8xf32>
    %119 = vector.shape_cast %118 : vector<2x8xf32> to vector<2x8x1xf32>
    %120 = tpu.reciprocal %119 {approx = true} : vector<2x8x1xf32> -> vector<2x8x1xf32>
    %121 = vector.broadcast %120 : vector<2x8x1xf32> to vector<2x8x8xf32>
    %122 = arith.mulf %117, %121 : vector<2x8x8xf32>
    "tpu.trace_start"() <{level = 10 : i32, message = "bqk,bkd->bqd"}> : () -> ()
    %cst_43 = arith.constant dense<0.000000e+00> : vector<2x8x8xf32>
    %123 = tpu.matmul %122, %110, %cst_43 {dimension_numbers = #tpu.dot_dimension_numbers<[2], [1], [1], [2], [0, 0, 0, 1, 1, 2], [0], [0]>} : vector<2x8x8xf32>, vector<2x8x8xf32>, vector<2x8x8xf32> -> vector<2x8x8xf32>
    "tpu.trace_stop"() : () -> ()
    %124 = vector.shape_cast %123 : vector<2x8x8xf32> to vector<16x8xf32>
    %125 = tpu.concatenate %64, %84, %104, %124 in 1 : vector<16x8xf32>, vector<16x8xf32>, vector<16x8xf32>, vector<16x8xf32> -> vector<16x32xf32>
    %c0_44 = arith.constant 0 : index
    %c0_45 = arith.constant 0 : index
    %126 = vector.load %arg11[%c0_44, %c0_45] : memref<32x32xf32, #tpu.memory_space<vmem>>, vector<32x32xf32>
    %cst_46 = arith.constant dense<0.000000e+00> : vector<16x32xf32>
    %127 = tpu.matmul %125, %126, %cst_46 {dimension_numbers = #tpu.dot_dimension_numbers<[1], [0], [0], [1], [0, 0, 1, 1], [], []>} : vector<16x32xf32>, vector<32x32xf32>, vector<16x32xf32> -> vector<16x32xf32>
    %c0_47 = arith.constant 0 : index
    %c0_48 = arith.constant 0 : index
    %128 = vector.load %arg12[%c0_47, %c0_48] : memref<1x32xf32, #tpu.memory_space<vmem>>, vector<1x32xf32>
    %129 = vector.broadcast %128 : vector<1x32xf32> to vector<16x32xf32>
    %130 = arith.addf %127, %129 : vector<16x32xf32>
    %131 = arith.addf %1, %130 : vector<16x32xf32>
    %c0_49 = arith.constant 0 : index
    %c0_50 = arith.constant 0 : index
    %132 = vector.load %arg13[%c0_49, %c0_50] : memref<1x32xf32, #tpu.memory_space<vmem>>, vector<1x32xf32>
    %c0_51 = arith.constant 0 : index
    %c0_52 = arith.constant 0 : index
    %133 = vector.load %arg14[%c0_51, %c0_52] : memref<1x32xf32, #tpu.memory_space<vmem>>, vector<1x32xf32>
    %cst_53 = arith.constant dense<0.000000e+00> : vector<16xf32>
    %134 = vector.multi_reduction <add>, %131, %cst_53 [1] : vector<16x32xf32> to vector<16xf32>
    %135 = vector.shape_cast %134 : vector<16xf32> to vector<16x1xf32>
    %cst_54 = arith.constant 3.200000e+01 : f32
    %136 = vector.broadcast %cst_54 : f32 to vector<16x1xf32>
    %137 = arith.divf %135, %136 : vector<16x1xf32>
    %138 = vector.broadcast %137 : vector<16x1xf32> to vector<16x32xf32>
    %139 = arith.subf %131, %138 : vector<16x32xf32>
    %140 = arith.mulf %139, %139 : vector<16x32xf32>
    %cst_55 = arith.constant dense<0.000000e+00> : vector<16xf32>
    %141 = vector.multi_reduction <add>, %140, %cst_55 [1] : vector<16x32xf32> to vector<16xf32>
    %142 = vector.shape_cast %141 : vector<16xf32> to vector<16x1xf32>
    %cst_56 = arith.constant 0.0322580636 : f32
    %143 = vector.broadcast %cst_56 : f32 to vector<16x1xf32>
    %144 = arith.mulf %142, %143 : vector<16x1xf32>
    %145 = math.sqrt %144 : vector<16x1xf32>
    %cst_57 = arith.constant 9.99999997E-7 : f32
    %146 = vector.broadcast %cst_57 : f32 to vector<16x1xf32>
    %147 = arith.addf %145, %146 : vector<16x1xf32>
    %148 = tpu.reciprocal %147 : vector<16x1xf32> -> vector<16x1xf32>
    %149 = vector.broadcast %137 : vector<16x1xf32> to vector<16x32xf32>
    %150 = arith.subf %131, %149 : vector<16x32xf32>
    %151 = vector.broadcast %132 : vector<1x32xf32> to vector<16x32xf32>
    %152 = arith.mulf %151, %150 : vector<16x32xf32>
    %153 = vector.broadcast %148 : vector<16x1xf32> to vector<16x32xf32>
    %154 = arith.mulf %152, %153 : vector<16x32xf32>
    %155 = vector.broadcast %133 : vector<1x32xf32> to vector<16x32xf32>
    %156 = arith.addf %154, %155 : vector<16x32xf32>
    %c0_58 = arith.constant 0 : index
    %c0_59 = arith.constant 0 : index
    %157 = vector.load %arg15[%c0_58, %c0_59] : memref<32x64xf32, #tpu.memory_space<vmem>>, vector<32x64xf32>
    %cst_60 = arith.constant dense<0.000000e+00> : vector<16x64xf32>
    %158 = tpu.matmul %156, %157, %cst_60 {dimension_numbers = #tpu.dot_dimension_numbers<[1], [0], [0], [1], [0, 0, 1, 1], [], []>} : vector<16x32xf32>, vector<32x64xf32>, vector<16x64xf32> -> vector<16x64xf32>
    %c0_61 = arith.constant 0 : index
    %c0_62 = arith.constant 0 : index
    %159 = vector.load %arg16[%c0_61, %c0_62] : memref<1x64xf32, #tpu.memory_space<vmem>>, vector<1x64xf32>
    %160 = vector.broadcast %159 : vector<1x64xf32> to vector<16x64xf32>
    %161 = arith.addf %158, %160 : vector<16x64xf32>
    %cst_63 = arith.constant 0.000000e+00 : f32
    %162 = vector.broadcast %cst_63 : f32 to vector<16x64xf32>
    %163 = arith.maximumf %161, %162 : vector<16x64xf32>
    %c0_64 = arith.constant 0 : index
    %c0_65 = arith.constant 0 : index
    %164 = vector.load %arg17[%c0_64, %c0_65] : memref<64x32xf32, #tpu.memory_space<vmem>>, vector<64x32xf32>
    %cst_66 = arith.constant dense<0.000000e+00> : vector<16x32xf32>
    %165 = tpu.matmul %163, %164, %cst_66 {dimension_numbers = #tpu.dot_dimension_numbers<[1], [0], [0], [1], [0, 0, 1, 1], [], []>} : vector<16x64xf32>, vector<64x32xf32>, vector<16x32xf32> -> vector<16x32xf32>
    %c0_67 = arith.constant 0 : index
    %c0_68 = arith.constant 0 : index
    %166 = vector.load %arg18[%c0_67, %c0_68] : memref<1x32xf32, #tpu.memory_space<vmem>>, vector<1x32xf32>
    %167 = vector.broadcast %166 : vector<1x32xf32> to vector<16x32xf32>
    %168 = arith.addf %165, %167 : vector<16x32xf32>
    %169 = arith.addf %131, %168 : vector<16x32xf32>
    %170 = vector.shape_cast %169 : vector<16x32xf32> to vector<2x8x32xf32>
    %c0_69 = arith.constant 0 : index
    %c0_70 = arith.constant 0 : index
    %c0_71 = arith.constant 0 : index
    %171 = vector.load %arg19[%c0_69, %c0_70, %c0_71] : memref<2x8x32xf32, #tpu.memory_space<vmem>>, vector<2x8x32xf32>
    tpu.vector_store %arg19[%c0_69, %c0_70, %c0_71], %170 {strides = array<i32>} : memref<2x8x32xf32, #tpu.memory_space<vmem>>, vector<2x8x32xf32>,
    return
  }
  func.func @transform_0(%arg0: i32) -> (i32, i32, i32) {
    %c0_i32 = arith.constant 0 : i32
    %c0_i32_0 = arith.constant 0 : i32
    %c0_i32_1 = arith.constant 0 : i32
    return %arg0, %c0_i32, %c0_i32_0 : i32, i32, i32
  }
  func.func @transform_1(%arg0: i32) -> (i32, i32, i32) {
    %c0_i32 = arith.constant 0 : i32
    %c0_i32_0 = arith.constant 0 : i32
    %c0_i32_1 = arith.constant 0 : i32
    return %arg0, %c0_i32, %c0_i32_0 : i32, i32, i32
  }
  func.func @transform_2(%arg0: i32) -> (i32, i32) {
    %c0_i32 = arith.constant 0 : i32
    %c0_i32_0 = arith.constant 0 : i32
    %c0_i32_1 = arith.constant 0 : i32
    return %c0_i32, %c0_i32_0 : i32, i32
  }
  func.func @transform_3(%arg0: i32) -> (i32, i32) {
    %c0_i32 = arith.constant 0 : i32
    %c0_i32_0 = arith.constant 0 : i32
    %c0_i32_1 = arith.constant 0 : i32
    return %c0_i32, %c0_i32_0 : i32, i32
  }
  func.func @transform_4(%arg0: i32) -> (i32, i32) {
    %c0_i32 = arith.constant 0 : i32
    %c0_i32_0 = arith.constant 0 : i32
    %c0_i32_1 = arith.constant 0 : i32
    return %c0_i32, %c0_i32_0 : i32, i32
  }
  func.func @transform_5(%arg0: i32) -> (i32, i32) {
    %c0_i32 = arith.constant 0 : i32
    %c0_i32_0 = arith.constant 0 : i32
    %c0_i32_1 = arith.constant 0 : i32
    return %c0_i32, %c0_i32_0 : i32, i32
  }
  func.func @transform_6(%arg0: i32) -> (i32, i32) {
    %c0_i32 = arith.constant 0 : i32
    %c0_i32_0 = arith.constant 0 : i32
    %c0_i32_1 = arith.constant 0 : i32
    return %c0_i32, %c0_i32_0 : i32, i32
  }
  func.func @transform_7(%arg0: i32) -> (i32, i32) {
    %c0_i32 = arith.constant 0 : i32
    %c0_i32_0 = arith.constant 0 : i32
    %c0_i32_1 = arith.constant 0 : i32
    return %c0_i32, %c0_i32_0 : i32, i32
  }
  func.func @transform_8(%arg0: i32) -> (i32, i32) {
    %c0_i32 = arith.constant 0 : i32
    %c0_i32_0 = arith.constant 0 : i32
    %c0_i32_1 = arith.constant 0 : i32
    return %c0_i32, %c0_i32_0 : i32, i32
  }
  func.func @transform_9(%arg0: i32) -> (i32, i32) {
    %c0_i32 = arith.constant 0 : i32
    %c0_i32_0 = arith.constant 0 : i32
    %c0_i32_1 = arith.constant 0 : i32
    return %c0_i32, %c0_i32_0 : i32, i32
  }
  func.func @transform_10(%arg0: i32) -> (i32, i32) {
    %c0_i32 = arith.constant 0 : i32
    %c0_i32_0 = arith.constant 0 : i32
    %c0_i32_1 = arith.constant 0 : i32
    return %c0_i32, %c0_i32_0 : i32, i32
  }
  func.func @transform_11(%arg0: i32) -> (i32, i32) {
    %c0_i32 = arith.constant 0 : i32
    %c0_i32_0 = arith.constant 0 : i32
    %c0_i32_1 = arith.constant 0 : i32
    return %c0_i32, %c0_i32_0 : i32, i32
  }
  func.func @transform_12(%arg0: i32) -> (i32, i32) {
    %c0_i32 = arith.constant 0 : i32
    %c0_i32_0 = arith.constant 0 : i32
    %c0_i32_1 = arith.constant 0 : i32
    return %c0_i32, %c0_i32_0 : i32, i32
  }
  func.func @transform_13(%arg0: i32) -> (i32, i32) {
    %c0_i32 = arith.constant 0 : i32
    %c0_i32_0 = arith.constant 0 : i32
    %c0_i32_1 = arith.constant 0 : i32
    return %c0_i32, %c0_i32_0 : i32, i32
  }
  func.func @transform_14(%arg0: i32) -> (i32, i32) {
    %c0_i32 = arith.constant 0 : i32
    %c0_i32_0 = arith.constant 0 : i32
    %c0_i32_1 = arith.constant 0 : i32
    return %c0_i32, %c0_i32_0 : i32, i32
  }
  func.func @transform_15(%arg0: i32) -> (i32, i32) {
    %c0_i32 = arith.constant 0 : i32
    %c0_i32_0 = arith.constant 0 : i32
    %c0_i32_1 = arith.constant 0 : i32
    return %c0_i32, %c0_i32_0 : i32, i32
  }
  func.func @transform_16(%arg0: i32) -> (i32, i32) {
    %c0_i32 = arith.constant 0 : i32
    %c0_i32_0 = arith.constant 0 : i32
    %c0_i32_1 = arith.constant 0 : i32
    return %c0_i32, %c0_i32_0 : i32, i32
  }
  func.func @transform_17(%arg0: i32) -> (i32, i32) {
    %c0_i32 = arith.constant 0 : i32
    %c0_i32_0 = arith.constant 0 : i32
    %c0_i32_1 = arith.constant 0 : i32
    return %c0_i32, %c0_i32_0 : i32, i32
  }
  func.func @transform_18(%arg0: i32) -> (i32, i32, i32) {
    %c0_i32 = arith.constant 0 : i32
    %c0_i32_0 = arith.constant 0 : i32
    %c0_i32_1 = arith.constant 0 : i32
    return %arg0, %c0_i32, %c0_i32_0 : i32, i32, i32
  }
}

</mosaic_0001>

<llo_original>
// kernel: tpu_custom_call.1
$region0: #{tpu_custom_call.1}
  #allocation0 [shape = 'u32[]', space=smem, size = 0x4, offset = 0x4, fixed_abs, tag = 'smem constant byte address 0x4 - core index']
  #allocation1 [shape = 'u32[144,128]{1,0:T(1,128)}', space=vmem, size = 0x12000, scoped, tag = 'internal scratch']
  %s0 = inlined_call_operand.hbm [shape: f32[2,8,32], index: 0, kind: input, shape index: {}]
  %s1 = inlined_call_operand.vmem [shape: f32[2,1,8], index: 1, kind: input, shape index: {}]
  %s2 = inlined_call_operand.vmem [shape: f32[1,32], index: 2, kind: input, shape index: {}]
  %s3 = inlined_call_operand.vmem [shape: f32[1,32], index: 3, kind: input, shape index: {}]
  %s4 = inlined_call_operand.vmem [shape: f32[32,32], index: 4, kind: input, shape index: {}]
  %s5 = inlined_call_operand.vmem [shape: f32[1,32], index: 5, kind: input, shape index: {}]
  %s6 = inlined_call_operand.vmem [shape: f32[32,32], index: 6, kind: input, shape index: {}]
  %s7 = inlined_call_operand.vmem [shape: f32[1,32], index: 7, kind: input, shape index: {}]
  %s8 = inlined_call_operand.vmem [shape: f32[32,32], index: 8, kind: input, shape index: {}]
  %s9 = inlined_call_operand.vmem [shape: f32[1,32], index: 9, kind: input, shape index: {}]
  %s10 = inlined_call_operand.hbm [shape: f32[32,32], index: 10, kind: input, shape index: {}]
  %s11 = inlined_call_operand.vmem [shape: f32[1,32], index: 11, kind: input, shape index: {}]
  %s12 = inlined_call_operand.vmem [shape: f32[1,32], index: 12, kind: input, shape index: {}]
  %s13 = inlined_call_operand.vmem [shape: f32[1,32], index: 13, kind: input, shape index: {}]
  %s14 = inlined_call_operand.hbm [shape: f32[32,64], index: 14, kind: input, shape index: {}]
  %s15 = inlined_call_operand.vmem [shape: f32[1,64], index: 15, kind: input, shape index: {}]
  %s16 = inlined_call_operand.vmem [shape: f32[64,32], index: 16, kind: input, shape index: {}]
  %s17 = inlined_call_operand.vmem [shape: f32[1,32], index: 17, kind: input, shape index: {}]
  %s18 = inlined_call_operand.hbm [shape: f32[2,8,32], index: 18, kind: output, shape index: {}]
  %s19 = sld [smem:[#allocation0]]
  $region94: #{tpu_custom_call.1} parent=0
    _
  %s21 = ssub.s32 1, %s19
  %s22 = scalar_select 0, %s21, %s19
  $region1: #{tpu_custom_call.1} parent=0
    #allocation2 [shape = 'u8[8192]{0}', space=vmem, size = 0x2000, scoped, tag = 'input window, operand 0, single buffered']
    #allocation3 [shape = 's32[1]{0}', space=sflag, size = 0x4, scoped, tag = 'scoped memory for tpu_custom_call.1']
    #allocation4 [shape = 's32[1]{0}', space=sflag, size = 0x4, scoped, tag = 'scoped memory for tpu_custom_call.1']
    #allocation5 [shape = 'u8[16384]{0}', space=vmem, size = 0x4000, scoped, tag = 'input window, operand 10, single buffered']
    #allocation6 [shape = 's32[1]{0}', space=sflag, size = 0x4, scoped, tag = 'scoped memory for tpu_custom_call.1']
    #allocation7 [shape = 'u8[16384]{0}', space=vmem, size = 0x4000, scoped, tag = 'input window, operand 14, single buffered']
    #allocation8 [shape = 'u8[8192]{0}', space=vmem, size = 0x2000, scoped, tag = 'output window, operand 0, single buffered']
    %23 = vsyncpa [#allocation3], 0
    %24 = vsyncpa [#allocation6], 0
    %25 = vsyncpa [#allocation4], 0
    // Predicated region
    $region2: #{tpu_custom_call.1} parent=1 // pred_check
      _
    $region3: #{tpu_custom_call.1} parent=1 // pred_check_branch
      %27 = sbr.rel (0) target = $region5
    $region4: #{tpu_custom_call.1} parent=1 // pred_region
      %s29 = ssub.s32 256, 256
      %30 = vsyncadd [#allocation3], %s29
      %s31 = sshll.u32 [#allocation2], 4
      %s32 = int_to_ptr.vmem [resolvable:$true] %s31
      %37 = dma.hbm_to_vmem [thread:$0]  %s0, 256, %s32, [#allocation3], 128, 128, 8
    $region5: #{tpu_custom_call.1} parent=1 // pred_fallthru
      _
    // Predicated region
    $region6: #{tpu_custom_call.1} parent=1 // pred_check
      _
    $region7: #{tpu_custom_call.1} parent=1 // pred_check_branch
      %39 = sbr.rel (0) target = $region9
    $region8: #{tpu_custom_call.1} parent=1 // pred_region
      _
    $region9: #{tpu_custom_call.1} parent=1 // pred_fallthru
      _
    // Predicated region
    $region10: #{tpu_custom_call.1} parent=1 // pred_check
      _
    $region11: #{tpu_custom_call.1} parent=1 // pred_check_branch
      %41 = sbr.rel (0) target = $region13
    $region12: #{tpu_custom_call.1} parent=1 // pred_region
      _
    $region13: #{tpu_custom_call.1} parent=1 // pred_fallthru
      _
    // Predicated region
    $region14: #{tpu_custom_call.1} parent=1 // pred_check
      _
    $region15: #{tpu_custom_call.1} parent=1 // pred_check_branch
      %43 = sbr.rel (0) target = $region17
    $region16: #{tpu_custom_call.1} parent=1 // pred_region
      _
    $region17: #{tpu_custom_call.1} parent=1 // pred_fallthru
      _
    // Predicated region
    $region18: #{tpu_custom_call.1} parent=1 // pred_check
      _
    $region19: #{tpu_custom_call.1} parent=1 // pred_check_branch
      %45 = sbr.rel (0) target = $region21
    $region20: #{tpu_custom_call.1} parent=1 // pred_region
      _
    $region21: #{tpu_custom_call.1} parent=1 // pred_fallthru
      _
    // Predicated region
    $region22: #{tpu_custom_call.1} parent=1 // pred_check
      _
    $region23: #{tpu_custom_call.1} parent=1 // pred_check_branch
      %47 = sbr.rel (0) target = $region25
    $region24: #{tpu_custom_call.1} parent=1 // pred_region
      _
    $region25: #{tpu_custom_call.1} parent=1 // pred_fallthru
      _
    // Predicated region
    $region26: #{tpu_custom_call.1} parent=1 // pred_check
      _
    $region27: #{tpu_custom_call.1} parent=1 // pred_check_branch
      %49 = sbr.rel (0) target = $region29
    $region28: #{tpu_custom_call.1} parent=1 // pred_region
      _
    $region29: #{tpu_custom_call.1} parent=1 // pred_fallthru
      _
    // Predicated region
    $region30: #{tpu_custom_call.1} parent=1 // pred_check
      _
    $region31: #{tpu_custom_call.1} parent=1 // pred_check_branch
      %51 = sbr.rel (0) target = $region33
    $region32: #{tpu_custom_call.1} parent=1 // pred_region
      _
    $region33: #{tpu_custom_call.1} parent=1 // pred_fallthru
      _
    // Predicated region
    $region34: #{tpu_custom_call.1} parent=1 // pred_check
      _
    $region35: #{tpu_custom_call.1} parent=1 // pred_check_branch
      %53 = sbr.rel (0) target = $region37
    $region36: #{tpu_custom_call.1} parent=1 // pred_region
      _
    $region37: #{tpu_custom_call.1} parent=1 // pred_fallthru
      _
    // Predicated region
    $region38: #{tpu_custom_call.1} parent=1 // pred_check
      _
    $region39: #{tpu_custom_call.1} parent=1 // pred_check_branch
      %55 = sbr.rel (0) target = $region41
    $region40: #{tpu_custom_call.1} parent=1 // pred_region
      _
    $region41: #{tpu_custom_call.1} parent=1 // pred_fallthru
      _
    // Predicated region
    $region42: #{tpu_custom_call.1} parent=1 // pred_check
      _
    $region43: #{tpu_custom_call.1} parent=1 // pred_check_branch
      %57 = sbr.rel (0) target = $region45
    $region44: #{tpu_custom_call.1} parent=1 // pred_region
      %s59 = ssub.s32 512, 512
      %60 = vsyncadd [#allocation6], %s59
      %s61 = sshll.u32 [#allocation5], 4
      %s62 = int_to_ptr.vmem [resolvable:$true] %s61
      %67 = dma.hbm_to_vmem [thread:$0]  %s10, 512, %s62, [#allocation6], 128, 128, 8
    $region45: #{tpu_custom_call.1} parent=1 // pred_fallthru
      _
    // Predicated region
    $region46: #{tpu_custom_call.1} parent=1 // pred_check
      _
    $region47: #{tpu_custom_call.1} parent=1 // pred_check_branch
      %69 = sbr.rel (0) target = $region49
    $region48: #{tpu_custom_call.1} parent=1 // pred_region
      _
    $region49: #{tpu_custom_call.1} parent=1 // pred_fallthru
      _
    // Predicated region
    $region50: #{tpu_custom_call.1} parent=1 // pred_check
      _
    $region51: #{tpu_custom_call.1} parent=1 // pred_check_branch
      %71 = sbr.rel (0) target = $region53
    $region52: #{tpu_custom_call.1} parent=1 // pred_region
      _
    $region53: #{tpu_custom_call.1} parent=1 // pred_fallthru
      _
    // Predicated region
    $region54: #{tpu_custom_call.1} parent=1 // pred_check
      _
    $region55: #{tpu_custom_call.1} parent=1 // pred_check_branch
      %73 = sbr.rel (0) target = $region57
    $region56: #{tpu_custom_call.1} parent=1 // pred_region
      _
    $region57: #{tpu_custom_call.1} parent=1 // pred_fallthru
      _
    // Predicated region
    $region58: #{tpu_custom_call.1} parent=1 // pred_check
      _
    $region59: #{tpu_custom_call.1} parent=1 // pred_check_branch
      %75 = sbr.rel (0) target = $region61
    $region60: #{tpu_custom_call.1} parent=1 // pred_region
      %s77 = ssub.s32 512, 512
      %78 = vsyncadd [#allocation6], %s77
      %s79 = sshll.u32 [#allocation7], 4
      %s80 = int_to_ptr.vmem [resolvable:$true] %s79
      %85 = dma.hbm_to_vmem [thread:$0]  %s14, 512, %s80, [#allocation6], 128, 128, 8
    $region61: #{tpu_custom_call.1} parent=1 // pred_fallthru
      _
    // Predicated region
    $region62: #{tpu_custom_call.1} parent=1 // pred_check
      _
    $region63: #{tpu_custom_call.1} parent=1 // pred_check_branch
      %87 = sbr.rel (0) target = $region65
    $region64: #{tpu_custom_call.1} parent=1 // pred_region
      _
    $region65: #{tpu_custom_call.1} parent=1 // pred_fallthru
      _
    // Predicated region
    $region66: #{tpu_custom_call.1} parent=1 // pred_check
      _
    $region67: #{tpu_custom_call.1} parent=1 // pred_check_branch
      %89 = sbr.rel (0) target = $region69
    $region68: #{tpu_custom_call.1} parent=1 // pred_region
      _
    $region69: #{tpu_custom_call.1} parent=1 // pred_fallthru
      _
    // Predicated region
    $region70: #{tpu_custom_call.1} parent=1 // pred_check
      _
    $region71: #{tpu_custom_call.1} parent=1 // pred_check_branch
      %91 = sbr.rel (0) target = $region73
    $region72: #{tpu_custom_call.1} parent=1 // pred_region
      _
    $region73: #{tpu_custom_call.1} parent=1 // pred_fallthru
      _
    // Predicated region
    $region74: #{tpu_custom_call.1} parent=1 // pred_check
      _
    $region75: #{tpu_custom_call.1} parent=1 // pred_check_branch
      %93 = sbr.rel (0) target = $region77
    $region76: #{tpu_custom_call.1} parent=1 // pred_region
      %94 = dma.done [#allocation3], 256
    $region77: #{tpu_custom_call.1} parent=1 // pred_fallthru
      _
    // Predicated region
    $region78: #{tpu_custom_call.1} parent=1 // pred_check
      _
    $region79: #{tpu_custom_call.1} parent=1 // pred_check_branch
      %96 = sbr.rel (0) target = $region81
    $region80: #{tpu_custom_call.1} parent=1 // pred_region
      %97 = dma.done [#allocation6], 512
    $region81: #{tpu_custom_call.1} parent=1 // pred_fallthru
      _
    // Predicated region
    $region82: #{tpu_custom_call.1} parent=1 // pred_check
      _
    $region83: #{tpu_custom_call.1} parent=1 // pred_check_branch
      %99 = sbr.rel (0) target = $region85
    $region84: #{tpu_custom_call.1} parent=1 // pred_region
      %100 = dma.done [#allocation6], 512
    $region85: #{tpu_custom_call.1} parent=1 // pred_fallthru
      _
    %v101 = vld [vmem:[#allocation2] sm:$0xff]
    %v102 = vld [vmem:[#allocation2 + $0x8] sm:$0xff]
    %v103 = vld [vmem:[%s2] sm:$0x1]
    %v104 = vld [vmem:[%s3] sm:$0x1]
    %vm105 = vcmask 261120
    %v106 = vsel %vm105, %v101, 0.0
    %107 = vadd.xlane.f32.xlu0 %v106
    %v108 = vpop.xlane.xlu0 %107
    %v109 = vsel %vm105, %v102, 0.0
    %110 = vadd.xlane.f32.xlu0 %v109
    %v111 = vpop.xlane.xlu0 %110
    %v112 = vrcp.pop 32.0
    %v113 = vmul.f32 %v108, %v112
    %v114 = vmul.f32 %v111, %v112
    %v115 = vsub.f32 %v101, %v113
    %v116 = vsub.f32 %v102, %v114
    %v117 = vmul.f32 %v115, %v115
    %v118 = vmul.f32 %v116, %v116
    %v119 = vsel %vm105, %v117, 0.0
    %120 = vadd.xlane.f32.xlu0 %v119
    %v121 = vpop.xlane.xlu0 %120
    %v122 = vsel %vm105, %v118, 0.0
    %123 = vadd.xlane.f32.xlu0 %v122
    %v124 = vpop.xlane.xlu0 %123
    %v125 = vmul.f32 %v121, 0.032258064
    %v126 = vmul.f32 %v124, 0.032258064
    %v127 = vrsqrt.pop %v125
    %v128 = vmul.f32 %v125, %v127
    %vm129 = vcmp.eq.f32.partialorder %v125, inf
    %v130 = vsel %vm129, %v125, %v128
    %vm131 = vcmp.eq.f32.partialorder %v125, 0.0
    %v132 = vand.u32 %v125, 2147483648
    %v133 = vsel %vm131, %v132, %v130
    %v134 = vrsqrt.pop %v126
    %v135 = vmul.f32 %v126, %v134
    %vm136 = vcmp.eq.f32.partialorder %v126, inf
    %v137 = vsel %vm136, %v126, %v135
    %vm138 = vcmp.eq.f32.partialorder %v126, 0.0
    %v139 = vand.u32 %v126, 2147483648
    %v140 = vsel %vm138, %v139, %v137
    %v141 = vadd.f32 %v133, 1e-06
    %v142 = vadd.f32 %v140, 1e-06
    %v143 = vrcp.pop %v141
    %v144 = vrcp.pop %v142
    %v146 = vlaneseq
    %v147 = vshrl.u32 %v146, 7
    %v148 = vsub.s32 0, %v147
    %v149 = vrot.slane %v103, %v148
    %v151 = vmul.f32 %v149, %v115
    %v152 = vmul.f32 %v149, %v116
    %v153 = vmul.f32 %v151, %v143
    %v154 = vmul.f32 %v152, %v144
    %v156 = vlaneseq
    %v157 = vshrl.u32 %v156, 7
    %v158 = vsub.s32 0, %v157
    %v159 = vrot.slane %v104, %v158
    %v161 = vadd.f32 %v153, %v159
    %v162 = vadd.f32 %v154, %v159
    %v163 = vld [vmem:[%s4] sm:$0xff]
    %v164 = vld [vmem:[%s4 + $0x8] sm:$0xff]
    %v165 = vld [vmem:[%s4 + $0x10] sm:$0xff]
    %v166 = vld [vmem:[%s4 + $0x18] sm:$0xff]
    %v167 = vld [vmem:[%s5] sm:$0x1]
    %v169 = vlaneseq
    %v170 = vshrl.u32 %v169, 7
    %v171 = vsub.s32 0, %v170
    %v172 = vrot.slane %v167, %v171
    %v175 = vsel %vm105, %v161, 0
    %v178 = vsel %vm105, %v162, 0
    %180 = vmatprep.subr.mxu0 0.0
    %181 = vmatpush1.msra.mxu0 %v163
    %182 = vmatprep.subr.mxu0 0.0
    %183 = vmatpush1.msra.mxu0 %v164
    %184 = vmatprep.subr.mxu0 0.0
    %185 = vmatpush1.msra.mxu0 %v165
    %186 = vmatprep.subr.mxu0 0.0
    %187 = vmatpush1.msra.mxu0 %v166
    %188 = vmatprep.subr.mxu0 0.0
    %189 = vmatpush1.msra.mxu0 0.0
    %190 = vmatprep.subr.mxu0 0.0
    %191 = vmatpush1.msra.mxu0 0.0
    %192 = vmatprep.subr.mxu0 0.0
    %193 = vmatpush1.msra.mxu0 0.0
    %194 = vmatprep.subr.mxu0 0.0
    %195 = vmatpush1.msra.mxu0 0.0
    %196 = vmatprep.subr.mxu0 0.0
    %197 = vmatpush1.msra.mxu0 0.0
    %198 = vmatprep.subr.mxu0 0.0
    %199 = vmatpush1.msra.mxu0 0.0
    %200 = vmatprep.subr.mxu0 0.0
    %201 = vmatpush1.msra.mxu0 0.0
    %202 = vmatprep.subr.mxu0 0.0
    %203 = vmatpush1.msra.mxu0 0.0
    %204 = vmatprep.subr.mxu0 0.0
    %205 = vmatpush1.msra.mxu0 0.0
    %206 = vmatprep.subr.mxu0 0.0
    %207 = vmatpush1.msra.mxu0 0.0
    %208 = vmatprep.subr.mxu0 0.0
    %209 = vmatpush1.msra.mxu0 0.0
    %210 = vmatprep.subr.mxu0 0.0
    %211 = vmatpush1.msra.mxu0 0.0
    %212 = vmatprep.subr.mxu0 0.0
    %213 = vmatpush1.msra.mxu0 0.0
    %214 = vmatprep.subr.mxu0 0.0
    %215 = vmatpush1.msra.mxu0 0.0
    %216 = vmatprep.subr.mxu0 0.0
    %217 = vmatpush1.msra.mxu0 0.0
    %218 = vmatprep.subr.mxu0 0.0
    %219 = vmatpush1.msra.mxu0 0.0
    %220 = vmatprep.subr.mxu0 0.0
    %221 = vmatpush1.msra.mxu0 0.0
    %222 = vmatprep.subr.mxu0 0.0
    %223 = vmatpush1.msra.mxu0 0.0
    %224 = vmatprep.subr.mxu0 0.0
    %225 = vmatpush1.msra.mxu0 0.0
    %226 = vmatprep.subr.mxu0 0.0
    %227 = vmatpush1.msra.mxu0 0.0
    %228 = vmatprep.subr.mxu0 0.0
    %229 = vmatpush1.msra.mxu0 0.0
    %230 = vmatprep.subr.mxu0 0.0
    %231 = vmatpush1.msra.mxu0 0.0
    %232 = vmatprep.subr.mxu0 0.0
    %233 = vmatpush1.msra.mxu0 0.0
    %234 = vmatprep.subr.mxu0 0.0
    %235 = vmatpush1.msra.mxu0 0.0
    %236 = vmatprep.subr.mxu0 0.0
    %237 = vmatpush1.msra.mxu0 0.0
    %238 = vmatprep.subr.mxu0 0.0
    %239 = vmatpush1.msra.mxu0 0.0
    %240 = vmatprep.subr.mxu0 0.0
    %241 = vmatpush1.msra.mxu0 0.0
    %242 = vmatprep.subr.mxu0 0.0
    %243 = vmatpush1.msra.mxu0 0.0
    %244 = vmatprep.mubr.f32.mxu0 0.0
    %245 = vmatmul.mubr.f32.gmra.mrb[0].mxu0 %v175
    %v246 = vpop.f32.mrb[0].mxu0
    %v247 = vadd.f32 %v172, %v246
    %v248 = vpop.f32.mrb[0].mxu0
    %249 = vmatprep.mubr.f32.mxu0 0.0
    %250 = vmatmul.mubr.f32.gmra.mrb[0].mxu0 %v178
    %v251 = vpop.f32.mrb[0].mxu0
    %v252 = vadd.f32 %v172, %v251
    %v253 = vpop.f32.mrb[0].mxu0
    %254 = vdwg.mxu0
    %v255 = vld [vmem:[%s6] sm:$0xff]
    %v256 = vld [vmem:[%s6 + $0x8] sm:$0xff]
    %v257 = vld [vmem:[%s6 + $0x10] sm:$0xff]
    %v258 = vld [vmem:[%s6 + $0x18] sm:$0xff]
    %v259 = vld [vmem:[%s7] sm:$0x1]
    %v261 = vlaneseq
    %v262 = vshrl.u32 %v261, 7
    %v263 = vsub.s32 0, %v262
    %v264 = vrot.slane %v259, %v263
    %266 = vmatprep.subr.mxu0 0.0
    %267 = vmatpush1.msra.mxu0 %v255
    %268 = vmatprep.subr.mxu0 0.0
    %269 = vmatpush1.msra.mxu0 %v256
    %270 = vmatprep.subr.mxu0 0.0
    %271 = vmatpush1.msra.mxu0 %v257
    %272 = vmatprep.subr.mxu0 0.0
    %273 = vmatpush1.msra.mxu0 %v258
    %274 = vmatprep.subr.mxu0 0.0
    %275 = vmatpush1.msra.mxu0 0.0
    %276 = vmatprep.subr.mxu0 0.0
    %277 = vmatpush1.msra.mxu0 0.0
    %278 = vmatprep.subr.mxu0 0.0
    %279 = vmatpush1.msra.mxu0 0.0
    %280 = vmatprep.subr.mxu0 0.0
    %281 = vmatpush1.msra.mxu0 0.0
    %282 = vmatprep.subr.mxu0 0.0
    %283 = vmatpush1.msra.mxu0 0.0
    %284 = vmatprep.subr.mxu0 0.0
    %285 = vmatpush1.msra.mxu0 0.0
    %286 = vmatprep.subr.mxu0 0.0
    %287 = vmatpush1.msra.mxu0 0.0
    %288 = vmatprep.subr.mxu0 0.0
    %289 = vmatpush1.msra.mxu0 0.0
    %290 = vmatprep.subr.mxu0 0.0
    %291 = vmatpush1.msra.mxu0 0.0
    %292 = vmatprep.subr.mxu0 0.0
    %293 = vmatpush1.msra.mxu0 0.0
    %294 = vmatprep.subr.mxu0 0.0
    %295 = vmatpush1.msra.mxu0 0.0
    %296 = vmatprep.subr.mxu0 0.0
    %297 = vmatpush1.msra.mxu0 0.0
    %298 = vmatprep.subr.mxu0 0.0
    %299 = vmatpush1.msra.mxu0 0.0
    %300 = vmatprep.subr.mxu0 0.0
    %301 = vmatpush1.msra.mxu0 0.0
    %302 = vmatprep.subr.mxu0 0.0
    %303 = vmatpush1.msra.mxu0 0.0
    %304 = vmatprep.subr.mxu0 0.0
    %305 = vmatpush1.msra.mxu0 0.0
    %306 = vmatprep.subr.mxu0 0.0
    %307 = vmatpush1.msra.mxu0 0.0
    %308 = vmatprep.subr.mxu0 0.0
    %309 = vmatpush1.msra.mxu0 0.0
    %310 = vmatprep.subr.mxu0 0.0
    %311 = vmatpush1.msra.mxu0 0.0
    %312 = vmatprep.subr.mxu0 0.0
    %313 = vmatpush1.msra.mxu0 0.0
    %314 = vmatprep.subr.mxu0 0.0
    %315 = vmatpush1.msra.mxu0 0.0
    %316 = vmatprep.subr.mxu0 0.0
    %317 = vmatpush1.msra.mxu0 0.0
    %318 = vmatprep.subr.mxu0 0.0
    %319 = vmatpush1.msra.mxu0 0.0
    %320 = vmatprep.subr.mxu0 0.0
    %321 = vmatpush1.msra.mxu0 0.0
    %322 = vmatprep.subr.mxu0 0.0
    %323 = vmatpush1.msra.mxu0 0.0
    %324 = vmatprep.subr.mxu0 0.0
    %325 = vmatpush1.msra.mxu0 0.0
    %326 = vmatprep.subr.mxu0 0.0
    %327 = vmatpush1.msra.mxu0 0.0
    %328 = vmatprep.subr.mxu0 0.0
    %329 = vmatpush1.msra.mxu0 0.0
    %330 = vmatprep.mubr.f32.mxu0 0.0
    %331 = vmatmul.mubr.f32.gmra.mrb[0].mxu0 %v175
    %v332 = vpop.f32.mrb[0].mxu0
    %v333 = vadd.f32 %v264, %v332
    %v334 = vpop.f32.mrb[0].mxu0
    %335 = vmatprep.mubr.f32.mxu0 0.0
    %336 = vmatmul.mubr.f32.gmra.mrb[0].mxu0 %v178
    %v337 = vpop.f32.mrb[0].mxu0
    %v338 = vadd.f32 %v264, %v337
    %v339 = vpop.f32.mrb[0].mxu0
    %340 = vdwg.mxu0
    %v341 = vld [vmem:[%s8] sm:$0xff]
    %v342 = vld [vmem:[%s8 + $0x8] sm:$0xff]
    %v343 = vld [vmem:[%s8 + $0x10] sm:$0xff]
    %v344 = vld [vmem:[%s8 + $0x18] sm:$0xff]
    %v345 = vld [vmem:[%s9] sm:$0x1]
    %v347 = vlaneseq
    %v348 = vshrl.u32 %v347, 7
    %v349 = vsub.s32 0, %v348
    %v350 = vrot.slane %v345, %v349
    %352 = vmatprep.subr.mxu0 0.0
    %353 = vmatpush1.msra.mxu0 %v341
    %354 = vmatprep.subr.mxu0 0.0
    %355 = vmatpush1.msra.mxu0 %v342
    %356 = vmatprep.subr.mxu0 0.0
    %357 = vmatpush1.msra.mxu0 %v343
    %358 = vmatprep.subr.mxu0 0.0
    %359 = vmatpush1.msra.mxu0 %v344
    %360 = vmatprep.subr.mxu0 0.0
    %361 = vmatpush1.msra.mxu0 0.0
    %362 = vmatprep.subr.mxu0 0.0
    %363 = vmatpush1.msra.mxu0 0.0
    %364 = vmatprep.subr.mxu0 0.0
    %365 = vmatpush1.msra.mxu0 0.0
    %366 = vmatprep.subr.mxu0 0.0
    %367 = vmatpush1.msra.mxu0 0.0
    %368 = vmatprep.subr.mxu0 0.0
    %369 = vmatpush1.msra.mxu0 0.0
    %370 = vmatprep.subr.mxu0 0.0
    %371 = vmatpush1.msra.mxu0 0.0
    %372 = vmatprep.subr.mxu0 0.0
    %373 = vmatpush1.msra.mxu0 0.0
    %374 = vmatprep.subr.mxu0 0.0
    %375 = vmatpush1.msra.mxu0 0.0
    %376 = vmatprep.subr.mxu0 0.0
    %377 = vmatpush1.msra.mxu0 0.0
    %378 = vmatprep.subr.mxu0 0.0
    %379 = vmatpush1.msra.mxu0 0.0
    %380 = vmatprep.subr.mxu0 0.0
    %381 = vmatpush1.msra.mxu0 0.0
    %382 = vmatprep.subr.mxu0 0.0
    %383 = vmatpush1.msra.mxu0 0.0
    %384 = vmatprep.subr.mxu0 0.0
    %385 = vmatpush1.msra.mxu0 0.0
    %386 = vmatprep.subr.mxu0 0.0
    %387 = vmatpush1.msra.mxu0 0.0
    %388 = vmatprep.subr.mxu0 0.0
    %389 = vmatpush1.msra.mxu0 0.0
    %390 = vmatprep.subr.mxu0 0.0
    %391 = vmatpush1.msra.mxu0 0.0
    %392 = vmatprep.subr.mxu0 0.0
    %393 = vmatpush1.msra.mxu0 0.0
    %394 = vmatprep.subr.mxu0 0.0
    %395 = vmatpush1.msra.mxu0 0.0
    %396 = vmatprep.subr.mxu0 0.0
    %397 = vmatpush1.msra.mxu0 0.0
    %398 = vmatprep.subr.mxu0 0.0
    %399 = vmatpush1.msra.mxu0 0.0
    %400 = vmatprep.subr.mxu0 0.0
    %401 = vmatpush1.msra.mxu0 0.0
    %402 = vmatprep.subr.mxu0 0.0
    %403 = vmatpush1.msra.mxu0 0.0
    %404 = vmatprep.subr.mxu0 0.0
    %405 = vmatpush1.msra.mxu0 0.0
    %406 = vmatprep.subr.mxu0 0.0
    %407 = vmatpush1.msra.mxu0 0.0
    %408 = vmatprep.subr.mxu0 0.0
    %409 = vmatpush1.msra.mxu0 0.0
    %410 = vmatprep.subr.mxu0 0.0
    %411 = vmatpush1.msra.mxu0 0.0
    %412 = vmatprep.subr.mxu0 0.0
    %413 = vmatpush1.msra.mxu0 0.0
    %414 = vmatprep.subr.mxu0 0.0
    %415 = vmatpush1.msra.mxu0 0.0
    %416 = vmatprep.mubr.f32.mxu0 0.0
    %417 = vmatmul.mubr.f32.gmra.mrb[0].mxu0 %v175
    %v418 = vpop.f32.mrb[0].mxu0
    %v419 = vadd.f32 %v350, %v418
    %v420 = vpop.f32.mrb[0].mxu0
    %421 = vmatprep.mubr.f32.mxu0 0.0
    %422 = vmatmul.mubr.f32.gmra.mrb[0].mxu0 %v178
    %v423 = vpop.f32.mrb[0].mxu0
    %v424 = vadd.f32 %v350, %v423
    %v425 = vpop.f32.mrb[0].mxu0
    %426 = vdwg.mxu0
    %v427 = vld [vmem:[%s1] sm:$0x1]
    %v428 = vld [vmem:[%s1 + $0x1] sm:$0x1]
    %v431 = vlaneseq
    %v432 = vshrl.u32 %v431, 7
    %v433 = vsub.s32 0, %v432
    %v434 = vrot.slane %v427, %v433
    %v435 = vlaneseq
    %v436 = vshrl.u32 %v435, 7
    %v437 = vsub.s32 0, %v436
    %v438 = vrot.slane %v428, %v437
    %vm441 = vcmask 64512
    %v443 = vsel %vm441, %v247, 0
    %v446 = vsel %vm441, %v333, 0
    %448 = vmatprep.subr.mxu0 0.0
    %449 = vmatpush1.xpose.msra.mxu0 %v446
    %450 = vmatprep.subr.mxu0 0.0
    %451 = vmatpush1.xpose.msra.mxu0 0.0
    %452 = vmatprep.subr.mxu0 0.0
    %453 = vmatpush1.xpose.msra.mxu0 0.0
    %454 = vmatprep.subr.mxu0 0.0
    %455 = vmatpush1.xpose.msra.mxu0 0.0
    %456 = vmatprep.subr.mxu0 0.0
    %457 = vmatpush1.xpose.msra.mxu0 0.0
    %458 = vmatprep.subr.mxu0 0.0
    %459 = vmatpush1.xpose.msra.mxu0 0.0
    %460 = vmatprep.subr.mxu0 0.0
    %461 = vmatpush1.xpose.msra.mxu0 0.0
    %462 = vmatprep.subr.mxu0 0.0
    %463 = vmatpush1.xpose.msra.mxu0 0.0
    %464 = vmatprep.subr.mxu0 0.0
    %465 = vmatpush1.xpose.msra.mxu0 0.0
    %466 = vmatprep.subr.mxu0 0.0
    %467 = vmatpush1.xpose.msra.mxu0 0.0
    %468 = vmatprep.subr.mxu0 0.0
    %469 = vmatpush1.xpose.msra.mxu0 0.0
    %470 = vmatprep.subr.mxu0 0.0
    %471 = vmatpush1.xpose.msra.mxu0 0.0
    %472 = vmatprep.subr.mxu0 0.0
    %473 = vmatpush1.xpose.msra.mxu0 0.0
    %474 = vmatprep.subr.mxu0 0.0
    %475 = vmatpush1.xpose.msra.mxu0 0.0
    %476 = vmatprep.subr.mxu0 0.0
    %477 = vmatpush1.xpose.msra.mxu0 0.0
    %478 = vmatprep.subr.mxu0 0.0
    %479 = vmatpush1.xpose.msra.mxu0 0.0
    %480 = vmatprep.subr.mxu0 0.0
    %481 = vmatpush1.xpose.msra.mxu0 0.0
    %482 = vmatprep.subr.mxu0 0.0
    %483 = vmatpush1.xpose.msra.mxu0 0.0
    %484 = vmatprep.subr.mxu0 0.0
    %485 = vmatpush1.xpose.msra.mxu0 0.0
    %486 = vmatprep.subr.mxu0 0.0
    %487 = vmatpush1.xpose.msra.mxu0 0.0
    %488 = vmatprep.subr.mxu0 0.0
    %489 = vmatpush1.xpose.msra.mxu0 0.0
    %490 = vmatprep.subr.mxu0 0.0
    %491 = vmatpush1.xpose.msra.mxu0 0.0
    %492 = vmatprep.subr.mxu0 0.0
    %493 = vmatpush1.xpose.msra.mxu0 0.0
    %494 = vmatprep.subr.mxu0 0.0
    %495 = vmatpush1.xpose.msra.mxu0 0.0
    %496 = vmatprep.subr.mxu0 0.0
    %497 = vmatpush1.xpose.msra.mxu0 0.0
    %498 = vmatprep.subr.mxu0 0.0
    %499 = vmatpush1.xpose.msra.mxu0 0.0
    %500 = vmatprep.subr.mxu0 0.0
    %501 = vmatpush1.xpose.msra.mxu0 0.0
    %502 = vmatprep.subr.mxu0 0.0
    %503 = vmatpush1.xpose.msra.mxu0 0.0
    %504 = vmatprep.subr.mxu0 0.0
    %505 = vmatpush1.xpose.msra.mxu0 0.0
    %506 = vmatprep.subr.mxu0 0.0
    %507 = vmatpush1.xpose.msra.mxu0 0.0
    %508 = vmatprep.subr.mxu0 0.0
    %509 = vmatpush1.xpose.msra.mxu0 0.0
    %510 = vmatprep.subr.mxu0 0.0
    %511 = vmatpush1.xpose.msra.mxu0 0.0
    %512 = vmatprep.mubr.f32.mxu0 0.0
    %513 = vmatmul.mubr.f32.gmra.mrb[0].mxu0 %v443
    %v514 = vpop.f32.mrb[0].mxu0
    %v515 = vadd.f32 %v434, %v514
    %v516 = vpop.f32.mrb[0].mxu0
    %517 = vdwg.mxu0
    %v519 = vsel %vm441, %v252, 0
    %v522 = vsel %vm441, %v338, 0
    %524 = vmatprep.subr.mxu0 0.0
    %525 = vmatpush1.xpose.msra.mxu0 %v522
    %526 = vmatprep.subr.mxu0 0.0
    %527 = vmatpush1.xpose.msra.mxu0 0.0
    %528 = vmatprep.subr.mxu0 0.0
    %529 = vmatpush1.xpose.msra.mxu0 0.0
    %530 = vmatprep.subr.mxu0 0.0
    %531 = vmatpush1.xpose.msra.mxu0 0.0
    %532 = vmatprep.subr.mxu0 0.0
    %533 = vmatpush1.xpose.msra.mxu0 0.0
    %534 = vmatprep.subr.mxu0 0.0
    %535 = vmatpush1.xpose.msra.mxu0 0.0
    %536 = vmatprep.subr.mxu0 0.0
    %537 = vmatpush1.xpose.msra.mxu0 0.0
    %538 = vmatprep.subr.mxu0 0.0
    %539 = vmatpush1.xpose.msra.mxu0 0.0
    %540 = vmatprep.subr.mxu0 0.0
    %541 = vmatpush1.xpose.msra.mxu0 0.0
    %542 = vmatprep.subr.mxu0 0.0
    %543 = vmatpush1.xpose.msra.mxu0 0.0
    %544 = vmatprep.subr.mxu0 0.0
    %545 = vmatpush1.xpose.msra.mxu0 0.0
    %546 = vmatprep.subr.mxu0 0.0
    %547 = vmatpush1.xpose.msra.mxu0 0.0
    %548 = vmatprep.subr.mxu0 0.0
    %549 = vmatpush1.xpose.msra.mxu0 0.0
    %550 = vmatprep.subr.mxu0 0.0
    %551 = vmatpush1.xpose.msra.mxu0 0.0
    %552 = vmatprep.subr.mxu0 0.0
    %553 = vmatpush1.xpose.msra.mxu0 0.0
    %554 = vmatprep.subr.mxu0 0.0
    %555 = vmatpush1.xpose.msra.mxu0 0.0
    %556 = vmatprep.subr.mxu0 0.0
    %557 = vmatpush1.xpose.msra.mxu0 0.0
    %558 = vmatprep.subr.mxu0 0.0
    %559 = vmatpush1.xpose.msra.mxu0 0.0
    %560 = vmatprep.subr.mxu0 0.0
    %561 = vmatpush1.xpose.msra.mxu0 0.0
    %562 = vmatprep.subr.mxu0 0.0
    %563 = vmatpush1.xpose.msra.mxu0 0.0
    %564 = vmatprep.subr.mxu0 0.0
    %565 = vmatpush1.xpose.msra.mxu0 0.0
    %566 = vmatprep.subr.mxu0 0.0
    %567 = vmatpush1.xpose.msra.mxu0 0.0
    %568 = vmatprep.subr.mxu0 0.0
    %569 = vmatpush1.xpose.msra.mxu0 0.0
    %570 = vmatprep.subr.mxu0 0.0
    %571 = vmatpush1.xpose.msra.mxu0 0.0
    %572 = vmatprep.subr.mxu0 0.0
    %573 = vmatpush1.xpose.msra.mxu0 0.0
    %574 = vmatprep.subr.mxu0 0.0
    %575 = vmatpush1.xpose.msra.mxu0 0.0
    %576 = vmatprep.subr.mxu0 0.0
    %577 = vmatpush1.xpose.msra.mxu0 0.0
    %578 = vmatprep.subr.mxu0 0.0
    %579 = vmatpush1.xpose.msra.mxu0 0.0
    %580 = vmatprep.subr.mxu0 0.0
    %581 = vmatpush1.xpose.msra.mxu0 0.0
    %582 = vmatprep.subr.mxu0 0.0
    %583 = vmatpush1.xpose.msra.mxu0 0.0
    %584 = vmatprep.subr.mxu0 0.0
    %585 = vmatpush1.xpose.msra.mxu0 0.0
    %586 = vmatprep.subr.mxu0 0.0
    %587 = vmatpush1.xpose.msra.mxu0 0.0
    %588 = vmatprep.mubr.f32.mxu0 0.0
    %589 = vmatmul.mubr.f32.gmra.mrb[0].mxu0 %v519
    %v590 = vpop.f32.mrb[0].mxu0
    %v591 = vadd.f32 %v438, %v590
    %v592 = vpop.f32.mrb[0].mxu0
    %593 = vdwg.mxu0
    %v594 = vsel %vm441, %v515, -inf
    %595 = vmax.xlane.f32.xlu0 %v594
    %v596 = vpop.xlane.xlu0 %595
    %v597 = vsel %vm441, %v591, -inf
    %598 = vmax.xlane.f32.xlu0 %v597
    %v599 = vpop.xlane.xlu0 %598
    %v600 = vsub.f32 %v515, %v596
    %v601 = vsub.f32 %v591, %v599
    %v602 = vmul.f32 %v600, 1.442695
    %v603 = vpow.pop %v602
    %v604 = vmul.f32 %v601, 1.442695
    %v605 = vpow.pop %v604
    %v606 = vsel %vm441, %v603, 0.0
    %607 = vadd.xlane.f32.xlu0 %v606
    %v608 = vpop.xlane.xlu0 %607
    %v609 = vsel %vm441, %v605, 0.0
    %610 = vadd.xlane.f32.xlu0 %v609
    %v611 = vpop.xlane.xlu0 %610
    %v612 = vrcp.pop %v608
    %v613 = vrcp.pop %v611
    %v614 = vmul.f32 %v603, %v612
    %v615 = vmul.f32 %v605, %v613
    %v617 = vsel %vm441, %v614, 0
    %619 = vmatprep.subr.mxu0 0.0
    %620 = vmatpush1.msra.mxu0 %v419
    %621 = vmatprep.subr.mxu0 0.0
    %622 = vmatpush1.msra.mxu0 0.0
    %623 = vmatprep.subr.mxu0 0.0
    %624 = vmatpush1.msra.mxu0 0.0
    %625 = vmatprep.subr.mxu0 0.0
    %626 = vmatpush1.msra.mxu0 0.0
    %627 = vmatprep.subr.mxu0 0.0
    %628 = vmatpush1.msra.mxu0 0.0
    %629 = vmatprep.subr.mxu0 0.0
    %630 = vmatpush1.msra.mxu0 0.0
    %631 = vmatprep.subr.mxu0 0.0
    %632 = vmatpush1.msra.mxu0 0.0
    %633 = vmatprep.subr.mxu0 0.0
    %634 = vmatpush1.msra.mxu0 0.0
    %635 = vmatprep.subr.mxu0 0.0
    %636 = vmatpush1.msra.mxu0 0.0
    %637 = vmatprep.subr.mxu0 0.0
    %638 = vmatpush1.msra.mxu0 0.0
    %639 = vmatprep.subr.mxu0 0.0
    %640 = vmatpush1.msra.mxu0 0.0
    %641 = vmatprep.subr.mxu0 0.0
    %642 = vmatpush1.msra.mxu0 0.0
    %643 = vmatprep.subr.mxu0 0.0
    %644 = vmatpush1.msra.mxu0 0.0
    %645 = vmatprep.subr.mxu0 0.0
    %646 = vmatpush1.msra.mxu0 0.0
    %647 = vmatprep.subr.mxu0 0.0
    %648 = vmatpush1.msra.mxu0 0.0
    %649 = vmatprep.subr.mxu0 0.0
    %650 = vmatpush1.msra.mxu0 0.0
    %651 = vmatprep.subr.mxu0 0.0
    %652 = vmatpush1.msra.mxu0 0.0
    %653 = vmatprep.subr.mxu0 0.0
    %654 = vmatpush1.msra.mxu0 0.0
    %655 = vmatprep.subr.mxu0 0.0
    %656 = vmatpush1.msra.mxu0 0.0
    %657 = vmatprep.subr.mxu0 0.0
    %658 = vmatpush1.msra.mxu0 0.0
    %659 = vmatprep.subr.mxu0 0.0
    %660 = vmatpush1.msra.mxu0 0.0
    %661 = vmatprep.subr.mxu0 0.0
    %662 = vmatpush1.msra.mxu0 0.0
    %663 = vmatprep.subr.mxu0 0.0
    %664 = vmatpush1.msra.mxu0 0.0
    %665 = vmatprep.subr.mxu0 0.0
    %666 = vmatpush1.msra.mxu0 0.0
    %667 = vmatprep.subr.mxu0 0.0
    %668 = vmatpush1.msra.mxu0 0.0
    %669 = vmatprep.subr.mxu0 0.0
    %670 = vmatpush1.msra.mxu0 0.0
    %671 = vmatprep.subr.mxu0 0.0
    %672 = vmatpush1.msra.mxu0 0.0
    %673 = vmatprep.subr.mxu0 0.0
    %674 = vmatpush1.msra.mxu0 0.0
    %675 = vmatprep.subr.mxu0 0.0
    %676 = vmatpush1.msra.mxu0 0.0
    %677 = vmatprep.subr.mxu0 0.0
    %678 = vmatpush1.msra.mxu0 0.0
    %679 = vmatprep.subr.mxu0 0.0
    %680 = vmatpush1.msra.mxu0 0.0
    %681 = vmatprep.subr.mxu0 0.0
    %682 = vmatpush1.msra.mxu0 0.0
    %683 = vmatprep.mubr.f32.mxu0 0.0
    %684 = vmatmul.mubr.f32.gmra.mrb[0].mxu0 %v617
    %v685 = vpop.f32.mrb[0].mxu0
    %v686 = vadd.f32 0.0, %v685
    %v687 = vpop.f32.mrb[0].mxu0
    %688 = vdwg.mxu0
    %v690 = vsel %vm441, %v615, 0
    %692 = vmatprep.subr.mxu0 0.0
    %693 = vmatpush1.msra.mxu0 %v424
    %694 = vmatprep.subr.mxu0 0.0
    %695 = vmatpush1.msra.mxu0 0.0
    %696 = vmatprep.subr.mxu0 0.0
    %697 = vmatpush1.msra.mxu0 0.0
    %698 = vmatprep.subr.mxu0 0.0
    %699 = vmatpush1.msra.mxu0 0.0
    %700 = vmatprep.subr.mxu0 0.0
    %701 = vmatpush1.msra.mxu0 0.0
    %702 = vmatprep.subr.mxu0 0.0
    %703 = vmatpush1.msra.mxu0 0.0
    %704 = vmatprep.subr.mxu0 0.0
    %705 = vmatpush1.msra.mxu0 0.0
    %706 = vmatprep.subr.mxu0 0.0
    %707 = vmatpush1.msra.mxu0 0.0
    %708 = vmatprep.subr.mxu0 0.0
    %709 = vmatpush1.msra.mxu0 0.0
    %710 = vmatprep.subr.mxu0 0.0
    %711 = vmatpush1.msra.mxu0 0.0
    %712 = vmatprep.subr.mxu0 0.0
    %713 = vmatpush1.msra.mxu0 0.0
    %714 = vmatprep.subr.mxu0 0.0
    %715 = vmatpush1.msra.mxu0 0.0
    %716 = vmatprep.subr.mxu0 0.0
    %717 = vmatpush1.msra.mxu0 0.0
    %718 = vmatprep.subr.mxu0 0.0
    %719 = vmatpush1.msra.mxu0 0.0
    %720 = vmatprep.subr.mxu0 0.0
    %721 = vmatpush1.msra.mxu0 0.0
    %722 = vmatprep.subr.mxu0 0.0
    %723 = vmatpush1.msra.mxu0 0.0
    %724 = vmatprep.subr.mxu0 0.0
    %725 = vmatpush1.msra.mxu0 0.0
    %726 = vmatprep.subr.mxu0 0.0
    %727 = vmatpush1.msra.mxu0 0.0
    %728 = vmatprep.subr.mxu0 0.0
    %729 = vmatpush1.msra.mxu0 0.0
    %730 = vmatprep.subr.mxu0 0.0
    %731 = vmatpush1.msra.mxu0 0.0
    %732 = vmatprep.subr.mxu0 0.0
    %733 = vmatpush1.msra.mxu0 0.0
    %734 = vmatprep.subr.mxu0 0.0
    %735 = vmatpush1.msra.mxu0 0.0
    %736 = vmatprep.subr.mxu0 0.0
    %737 = vmatpush1.msra.mxu0 0.0
    %738 = vmatprep.subr.mxu0 0.0
    %739 = vmatpush1.msra.mxu0 0.0
    %740 = vmatprep.subr.mxu0 0.0
    %741 = vmatpush1.msra.mxu0 0.0
    %742 = vmatprep.subr.mxu0 0.0
    %743 = vmatpush1.msra.mxu0 0.0
    %744 = vmatprep.subr.mxu0 0.0
    %745 = vmatpush1.msra.mxu0 0.0
    %746 = vmatprep.subr.mxu0 0.0
    %747 = vmatpush1.msra.mxu0 0.0
    %748 = vmatprep.subr.mxu0 0.0
    %749 = vmatpush1.msra.mxu0 0.0
    %750 = vmatprep.subr.mxu0 0.0
    %751 = vmatpush1.msra.mxu0 0.0
    %752 = vmatprep.subr.mxu0 0.0
    %753 = vmatpush1.msra.mxu0 0.0
    %754 = vmatprep.subr.mxu0 0.0
    %755 = vmatpush1.msra.mxu0 0.0
    %756 = vmatprep.mubr.f32.mxu0 0.0
    %757 = vmatmul.mubr.f32.gmra.mrb[0].mxu0 %v690
    %v758 = vpop.f32.mrb[0].mxu0
    %v759 = vadd.f32 0.0, %v758
    %v760 = vpop.f32.mrb[0].mxu0
    %761 = vdwg.mxu0
    %762 = vrot.lane.b32.xlu0 %v247, 120
    %v763 = vpop.permute.xlu0 %762
    %764 = vrot.lane.b32.xlu0 %v333, 120
    %v765 = vpop.permute.xlu0 %764
    %v766 = vsel %vm441, %v763, 0
    %v768 = vsel %vm441, %v765, 0
    %770 = vmatprep.subr.mxu0 0.0
    %771 = vmatpush1.xpose.msra.mxu0 %v768
    %772 = vmatprep.subr.mxu0 0.0
    %773 = vmatpush1.xpose.msra.mxu0 0.0
    %774 = vmatprep.subr.mxu0 0.0
    %775 = vmatpush1.xpose.msra.mxu0 0.0
    %776 = vmatprep.subr.mxu0 0.0
    %777 = vmatpush1.xpose.msra.mxu0 0.0
    %778 = vmatprep.subr.mxu0 0.0
    %779 = vmatpush1.xpose.msra.mxu0 0.0
    %780 = vmatprep.subr.mxu0 0.0
    %781 = vmatpush1.xpose.msra.mxu0 0.0
    %782 = vmatprep.subr.mxu0 0.0
    %783 = vmatpush1.xpose.msra.mxu0 0.0
    %784 = vmatprep.subr.mxu0 0.0
    %785 = vmatpush1.xpose.msra.mxu0 0.0
    %786 = vmatprep.subr.mxu0 0.0
    %787 = vmatpush1.xpose.msra.mxu0 0.0
    %788 = vmatprep.subr.mxu0 0.0
    %789 = vmatpush1.xpose.msra.mxu0 0.0
    %790 = vmatprep.subr.mxu0 0.0
    %791 = vmatpush1.xpose.msra.mxu0 0.0
    %792 = vmatprep.subr.mxu0 0.0
    %793 = vmatpush1.xpose.msra.mxu0 0.0
    %794 = vmatprep.subr.mxu0 0.0
    %795 = vmatpush1.xpose.msra.mxu0 0.0
    %796 = vmatprep.subr.mxu0 0.0
    %797 = vmatpush1.xpose.msra.mxu0 0.0
    %798 = vmatprep.subr.mxu0 0.0
    %799 = vmatpush1.xpose.msra.mxu0 0.0
    %800 = vmatprep.subr.mxu0 0.0
    %801 = vmatpush1.xpose.msra.mxu0 0.0
    %802 = vmatprep.subr.mxu0 0.0
    %803 = vmatpush1.xpose.msra.mxu0 0.0
    %804 = vmatprep.subr.mxu0 0.0
    %805 = vmatpush1.xpose.msra.mxu0 0.0
    %806 = vmatprep.subr.mxu0 0.0
    %807 = vmatpush1.xpose.msra.mxu0 0.0
    %808 = vmatprep.subr.mxu0 0.0
    %809 = vmatpush1.xpose.msra.mxu0 0.0
    %810 = vmatprep.subr.mxu0 0.0
    %811 = vmatpush1.xpose.msra.mxu0 0.0
    %812 = vmatprep.subr.mxu0 0.0
    %813 = vmatpush1.xpose.msra.mxu0 0.0
    %814 = vmatprep.subr.mxu0 0.0
    %815 = vmatpush1.xpose.msra.mxu0 0.0
    %816 = vmatprep.subr.mxu0 0.0
    %817 = vmatpush1.xpose.msra.mxu0 0.0
    %818 = vmatprep.subr.mxu0 0.0
    %819 = vmatpush1.xpose.msra.mxu0 0.0
    %820 = vmatprep.subr.mxu0 0.0
    %821 = vmatpush1.xpose.msra.mxu0 0.0
    %822 = vmatprep.subr.mxu0 0.0
    %823 = vmatpush1.xpose.msra.mxu0 0.0
    %824 = vmatprep.subr.mxu0 0.0
    %825 = vmatpush1.xpose.msra.mxu0 0.0
    %826 = vmatprep.subr.mxu0 0.0
    %827 = vmatpush1.xpose.msra.mxu0 0.0
    %828 = vmatprep.subr.mxu0 0.0
    %829 = vmatpush1.xpose.msra.mxu0 0.0
    %830 = vmatprep.subr.mxu0 0.0
    %831 = vmatpush1.xpose.msra.mxu0 0.0
    %832 = vmatprep.subr.mxu0 0.0
    %833 = vmatpush1.xpose.msra.mxu0 0.0
    %834 = vmatprep.mubr.f32.mxu0 0.0
    %835 = vmatmul.mubr.f32.gmra.mrb[0].mxu0 %v766
    %v836 = vpop.f32.mrb[0].mxu0
    %v837 = vadd.f32 %v434, %v836
    %v838 = vpop.f32.mrb[0].mxu0
    %839 = vdwg.mxu0
    %840 = vrot.lane.b32.xlu0 %v252, 120
    %v841 = vpop.permute.xlu0 %840
    %842 = vrot.lane.b32.xlu0 %v338, 120
    %v843 = vpop.permute.xlu0 %842
    %v844 = vsel %vm441, %v841, 0
    %v846 = vsel %vm441, %v843, 0
    %848 = vmatprep.subr.mxu0 0.0
    %849 = vmatpush1.xpose.msra.mxu0 %v846
    %850 = vmatprep.subr.mxu0 0.0
    %851 = vmatpush1.xpose.msra.mxu0 0.0
    %852 = vmatprep.subr.mxu0 0.0
    %853 = vmatpush1.xpose.msra.mxu0 0.0
    %854 = vmatprep.subr.mxu0 0.0
    %855 = vmatpush1.xpose.msra.mxu0 0.0
    %856 = vmatprep.subr.mxu0 0.0
    %857 = vmatpush1.xpose.msra.mxu0 0.0
    %858 = vmatprep.subr.mxu0 0.0
    %859 = vmatpush1.xpose.msra.mxu0 0.0
    %860 = vmatprep.subr.mxu0 0.0
    %861 = vmatpush1.xpose.msra.mxu0 0.0
    %862 = vmatprep.subr.mxu0 0.0
    %863 = vmatpush1.xpose.msra.mxu0 0.0
    %864 = vmatprep.subr.mxu0 0.0
    %865 = vmatpush1.xpose.msra.mxu0 0.0
    %866 = vmatprep.subr.mxu0 0.0
    %867 = vmatpush1.xpose.msra.mxu0 0.0
    %868 = vmatprep.subr.mxu0 0.0
    %869 = vmatpush1.xpose.msra.mxu0 0.0
    %870 = vmatprep.subr.mxu0 0.0
    %871 = vmatpush1.xpose.msra.mxu0 0.0
    %872 = vmatprep.subr.mxu0 0.0
    %873 = vmatpush1.xpose.msra.mxu0 0.0
    %874 = vmatprep.subr.mxu0 0.0
    %875 = vmatpush1.xpose.msra.mxu0 0.0
    %876 = vmatprep.subr.mxu0 0.0
    %877 = vmatpush1.xpose.msra.mxu0 0.0
    %878 = vmatprep.subr.mxu0 0.0
    %879 = vmatpush1.xpose.msra.mxu0 0.0
    %880 = vmatprep.subr.mxu0 0.0
    %881 = vmatpush1.xpose.msra.mxu0 0.0
    %882 = vmatprep.subr.mxu0 0.0
    %883 = vmatpush1.xpose.msra.mxu0 0.0
    %884 = vmatprep.subr.mxu0 0.0
    %885 = vmatpush1.xpose.msra.mxu0 0.0
    %886 = vmatprep.subr.mxu0 0.0
    %887 = vmatpush1.xpose.msra.mxu0 0.0
    %888 = vmatprep.subr.mxu0 0.0
    %889 = vmatpush1.xpose.msra.mxu0 0.0
    %890 = vmatprep.subr.mxu0 0.0
    %891 = vmatpush1.xpose.msra.mxu0 0.0
    %892 = vmatprep.subr.mxu0 0.0
    %893 = vmatpush1.xpose.msra.mxu0 0.0
    %894 = vmatprep.subr.mxu0 0.0
    %895 = vmatpush1.xpose.msra.mxu0 0.0
    %896 = vmatprep.subr.mxu0 0.0
    %897 = vmatpush1.xpose.msra.mxu0 0.0
    %898 = vmatprep.subr.mxu0 0.0
    %899 = vmatpush1.xpose.msra.mxu0 0.0
    %900 = vmatprep.subr.mxu0 0.0
    %901 = vmatpush1.xpose.msra.mxu0 0.0
    %902 = vmatprep.subr.mxu0 0.0
    %903 = vmatpush1.xpose.msra.mxu0 0.0
    %904 = vmatprep.subr.mxu0 0.0
    %905 = vmatpush1.xpose.msra.mxu0 0.0
    %906 = vmatprep.subr.mxu0 0.0
    %907 = vmatpush1.xpose.msra.mxu0 0.0
    %908 = vmatprep.subr.mxu0 0.0
    %909 = vmatpush1.xpose.msra.mxu0 0.0
    %910 = vmatprep.subr.mxu0 0.0
    %911 = vmatpush1.xpose.msra.mxu0 0.0
    %912 = vmatprep.mubr.f32.mxu0 0.0
    %913 = vmatmul.mubr.f32.gmra.mrb[0].mxu0 %v844
    %v914 = vpop.f32.mrb[0].mxu0
    %v915 = vadd.f32 %v438, %v914
    %v916 = vpop.f32.mrb[0].mxu0
    %917 = vdwg.mxu0
    %v918 = vsel %vm441, %v837, -inf
    %919 = vmax.xlane.f32.xlu0 %v918
    %v920 = vpop.xlane.xlu0 %919
    %v921 = vsel %vm441, %v915, -inf
    %922 = vmax.xlane.f32.xlu0 %v921
    %v923 = vpop.xlane.xlu0 %922
    %v924 = vsub.f32 %v837, %v920
    %v925 = vsub.f32 %v915, %v923
    %v926 = vmul.f32 %v924, 1.442695
    %v927 = vpow.pop %v926
    %v928 = vmul.f32 %v925, 1.442695
    %v929 = vpow.pop %v928
    %v930 = vsel %vm441, %v927, 0.0
    %931 = vadd.xlane.f32.xlu0 %v930
    %v932 = vpop.xlane.xlu0 %931
    %v933 = vsel %vm441, %v929, 0.0
    %934 = vadd.xlane.f32.xlu0 %v933
    %v935 = vpop.xlane.xlu0 %934
    %v936 = vrcp.pop %v932
    %v937 = vrcp.pop %v935
    %v938 = vmul.f32 %v927, %v936
    %v939 = vmul.f32 %v929, %v937
    %941 = vrot.lane.b32.xlu0 %v419, 120
    %v942 = vpop.permute.xlu0 %941
    %v945 = vsel %vm441, %v938, 0
    %947 = vmatprep.subr.mxu0 0.0
    %948 = vmatpush1.msra.mxu0 %v942
    %949 = vmatprep.subr.mxu0 0.0
    %950 = vmatpush1.msra.mxu0 0.0
    %951 = vmatprep.subr.mxu0 0.0
    %952 = vmatpush1.msra.mxu0 0.0
    %953 = vmatprep.subr.mxu0 0.0
    %954 = vmatpush1.msra.mxu0 0.0
    %955 = vmatprep.subr.mxu0 0.0
    %956 = vmatpush1.msra.mxu0 0.0
    %957 = vmatprep.subr.mxu0 0.0
    %958 = vmatpush1.msra.mxu0 0.0
    %959 = vmatprep.subr.mxu0 0.0
    %960 = vmatpush1.msra.mxu0 0.0
    %961 = vmatprep.subr.mxu0 0.0
    %962 = vmatpush1.msra.mxu0 0.0
    %963 = vmatprep.subr.mxu0 0.0
    %964 = vmatpush1.msra.mxu0 0.0
    %965 = vmatprep.subr.mxu0 0.0
    %966 = vmatpush1.msra.mxu0 0.0
    %967 = vmatprep.subr.mxu0 0.0
    %968 = vmatpush1.msra.mxu0 0.0
    %969 = vmatprep.subr.mxu0 0.0
    %970 = vmatpush1.msra.mxu0 0.0
    %971 = vmatprep.subr.mxu0 0.0
    %972 = vmatpush1.msra.mxu0 0.0
    %973 = vmatprep.subr.mxu0 0.0
    %974 = vmatpush1.msra.mxu0 0.0
    %975 = vmatprep.subr.mxu0 0.0
    %976 = vmatpush1.msra.mxu0 0.0
    %977 = vmatprep.subr.mxu0 0.0
    %978 = vmatpush1.msra.mxu0 0.0
    %979 = vmatprep.subr.mxu0 0.0
    %980 = vmatpush1.msra.mxu0 0.0
    %981 = vmatprep.subr.mxu0 0.0
    %982 = vmatpush1.msra.mxu0 0.0
    %983 = vmatprep.subr.mxu0 0.0
    %984 = vmatpush1.msra.mxu0 0.0
    %985 = vmatprep.subr.mxu0 0.0
    %986 = vmatpush1.msra.mxu0 0.0
    %987 = vmatprep.subr.mxu0 0.0
    %988 = vmatpush1.msra.mxu0 0.0
    %989 = vmatprep.subr.mxu0 0.0
    %990 = vmatpush1.msra.mxu0 0.0
    %991 = vmatprep.subr.mxu0 0.0
    %992 = vmatpush1.msra.mxu0 0.0
    %993 = vmatprep.subr.mxu0 0.0
    %994 = vmatpush1.msra.mxu0 0.0
    %995 = vmatprep.subr.mxu0 0.0
    %996 = vmatpush1.msra.mxu0 0.0
    %997 = vmatprep.subr.mxu0 0.0
    %998 = vmatpush1.msra.mxu0 0.0
    %999 = vmatprep.subr.mxu0 0.0
    %1000 = vmatpush1.msra.mxu0 0.0
    %1001 = vmatprep.subr.mxu0 0.0
    %1002 = vmatpush1.msra.mxu0 0.0
    %1003 = vmatprep.subr.mxu0 0.0
    %1004 = vmatpush1.msra.mxu0 0.0
    %1005 = vmatprep.subr.mxu0 0.0
    %1006 = vmatpush1.msra.mxu0 0.0
    %1007 = vmatprep.subr.mxu0 0.0
    %1008 = vmatpush1.msra.mxu0 0.0
    %1009 = vmatprep.subr.mxu0 0.0
    %1010 = vmatpush1.msra.mxu0 0.0
    %1011 = vmatprep.mubr.f32.mxu0 0.0
    %1012 = vmatmul.mubr.f32.gmra.mrb[0].mxu0 %v945
    %v1013 = vpop.f32.mrb[0].mxu0
    %v1014 = vadd.f32 0.0, %v1013
    %v1015 = vpop.f32.mrb[0].mxu0
    %1016 = vdwg.mxu0
    %1018 = vrot.lane.b32.xlu0 %v424, 120
    %v1019 = vpop.permute.xlu0 %1018
    %v1022 = vsel %vm441, %v939, 0
    %1024 = vmatprep.subr.mxu0 0.0
    %1025 = vmatpush1.msra.mxu0 %v1019
    %1026 = vmatprep.subr.mxu0 0.0
    %1027 = vmatpush1.msra.mxu0 0.0
    %1028 = vmatprep.subr.mxu0 0.0
    %1029 = vmatpush1.msra.mxu0 0.0
    %1030 = vmatprep.subr.mxu0 0.0
    %1031 = vmatpush1.msra.mxu0 0.0
    %1032 = vmatprep.subr.mxu0 0.0
    %1033 = vmatpush1.msra.mxu0 0.0
    %1034 = vmatprep.subr.mxu0 0.0
    %1035 = vmatpush1.msra.mxu0 0.0
    %1036 = vmatprep.subr.mxu0 0.0
    %1037 = vmatpush1.msra.mxu0 0.0
    %1038 = vmatprep.subr.mxu0 0.0
    %1039 = vmatpush1.msra.mxu0 0.0
    %1040 = vmatprep.subr.mxu0 0.0
    %1041 = vmatpush1.msra.mxu0 0.0
    %1042 = vmatprep.subr.mxu0 0.0
    %1043 = vmatpush1.msra.mxu0 0.0
    %1044 = vmatprep.subr.mxu0 0.0
    %1045 = vmatpush1.msra.mxu0 0.0
    %1046 = vmatprep.subr.mxu0 0.0
    %1047 = vmatpush1.msra.mxu0 0.0
    %1048 = vmatprep.subr.mxu0 0.0
    %1049 = vmatpush1.msra.mxu0 0.0
    %1050 = vmatprep.subr.mxu0 0.0
    %1051 = vmatpush1.msra.mxu0 0.0
    %1052 = vmatprep.subr.mxu0 0.0
    %1053 = vmatpush1.msra.mxu0 0.0
    %1054 = vmatprep.subr.mxu0 0.0
    %1055 = vmatpush1.msra.mxu0 0.0
    %1056 = vmatprep.subr.mxu0 0.0
    %1057 = vmatpush1.msra.mxu0 0.0
    %1058 = vmatprep.subr.mxu0 0.0
    %1059 = vmatpush1.msra.mxu0 0.0
    %1060 = vmatprep.subr.mxu0 0.0
    %1061 = vmatpush1.msra.mxu0 0.0
    %1062 = vmatprep.subr.mxu0 0.0
    %1063 = vmatpush1.msra.mxu0 0.0
    %1064 = vmatprep.subr.mxu0 0.0
    %1065 = vmatpush1.msra.mxu0 0.0
    %1066 = vmatprep.subr.mxu0 0.0
    %1067 = vmatpush1.msra.mxu0 0.0
    %1068 = vmatprep.subr.mxu0 0.0
    %1069 = vmatpush1.msra.mxu0 0.0
    %1070 = vmatprep.subr.mxu0 0.0
    %1071 = vmatpush1.msra.mxu0 0.0
    %1072 = vmatprep.subr.mxu0 0.0
    %1073 = vmatpush1.msra.mxu0 0.0
    %1074 = vmatprep.subr.mxu0 0.0
    %1075 = vmatpush1.msra.mxu0 0.0
    %1076 = vmatprep.subr.mxu0 0.0
    %1077 = vmatpush1.msra.mxu0 0.0
    %1078 = vmatprep.subr.mxu0 0.0
    %1079 = vmatpush1.msra.mxu0 0.0
    %1080 = vmatprep.subr.mxu0 0.0
    %1081 = vmatpush1.msra.mxu0 0.0
    %1082 = vmatprep.subr.mxu0 0.0
    %1083 = vmatpush1.msra.mxu0 0.0
    %1084 = vmatprep.subr.mxu0 0.0
    %1085 = vmatpush1.msra.mxu0 0.0
    %1086 = vmatprep.subr.mxu0 0.0
    %1087 = vmatpush1.msra.mxu0 0.0
    %1088 = vmatprep.mubr.f32.mxu0 0.0
    %1089 = vmatmul.mubr.f32.gmra.mrb[0].mxu0 %v1022
    %v1090 = vpop.f32.mrb[0].mxu0
    %v1091 = vadd.f32 0.0, %v1090
    %v1092 = vpop.f32.mrb[0].mxu0
    %1093 = vdwg.mxu0
    %1094 = vrot.lane.b32.xlu0 %v247, 112
    %v1095 = vpop.permute.xlu0 %1094
    %1096 = vrot.lane.b32.xlu0 %v333, 112
    %v1097 = vpop.permute.xlu0 %1096
    %v1098 = vsel %vm441, %v1095, 0
    %v1100 = vsel %vm441, %v1097, 0
    %1102 = vmatprep.subr.mxu0 0.0
    %1103 = vmatpush1.xpose.msra.mxu0 %v1100
    %1104 = vmatprep.subr.mxu0 0.0
    %1105 = vmatpush1.xpose.msra.mxu0 0.0
    %1106 = vmatprep.subr.mxu0 0.0
    %1107 = vmatpush1.xpose.msra.mxu0 0.0
    %1108 = vmatprep.subr.mxu0 0.0
    %1109 = vmatpush1.xpose.msra.mxu0 0.0
    %1110 = vmatprep.subr.mxu0 0.0
    %1111 = vmatpush1.xpose.msra.mxu0 0.0
    %1112 = vmatprep.subr.mxu0 0.0
    %1113 = vmatpush1.xpose.msra.mxu0 0.0
    %1114 = vmatprep.subr.mxu0 0.0
    %1115 = vmatpush1.xpose.msra.mxu0 0.0
    %1116 = vmatprep.subr.mxu0 0.0
    %1117 = vmatpush1.xpose.msra.mxu0 0.0
    %1118 = vmatprep.subr.mxu0 0.0
    %1119 = vmatpush1.xpose.msra.mxu0 0.0
    %1120 = vmatprep.subr.mxu0 0.0
    %1121 = vmatpush1.xpose.msra.mxu0 0.0
    %1122 = vmatprep.subr.mxu0 0.0
    %1123 = vmatpush1.xpose.msra.mxu0 0.0
    %1124 = vmatprep.subr.mxu0 0.0
    %1125 = vmatpush1.xpose.msra.mxu0 0.0
    %1126 = vmatprep.subr.mxu0 0.0
    %1127 = vmatpush1.xpose.msra.mxu0 0.0
    %1128 = vmatprep.subr.mxu0 0.0
    %1129 = vmatpush1.xpose.msra.mxu0 0.0
    %1130 = vmatprep.subr.mxu0 0.0
    %1131 = vmatpush1.xpose.msra.mxu0 0.0
    %1132 = vmatprep.subr.mxu0 0.0
    %1133 = vmatpush1.xpose.msra.mxu0 0.0
    %1134 = vmatprep.subr.mxu0 0.0
    %1135 = vmatpush1.xpose.msra.mxu0 0.0
    %1136 = vmatprep.subr.mxu0 0.0
    %1137 = vmatpush1.xpose.msra.mxu0 0.0
    %1138 = vmatprep.subr.mxu0 0.0
    %1139 = vmatpush1.xpose.msra.mxu0 0.0
    %1140 = vmatprep.subr.mxu0 0.0
    %1141 = vmatpush1.xpose.msra.mxu0 0.0
    %1142 = vmatprep.subr.mxu0 0.0
    %1143 = vmatpush1.xpose.msra.mxu0 0.0
    %1144 = vmatprep.subr.mxu0 0.0
    %1145 = vmatpush1.xpose.msra.mxu0 0.0
    %1146 = vmatprep.subr.mxu0 0.0
    %1147 = vmatpush1.xpose.msra.mxu0 0.0
    %1148 = vmatprep.subr.mxu0 0.0
    %1149 = vmatpush1.xpose.msra.mxu0 0.0
    %1150 = vmatprep.subr.mxu0 0.0
    %1151 = vmatpush1.xpose.msra.mxu0 0.0
    %1152 = vmatprep.subr.mxu0 0.0
    %1153 = vmatpush1.xpose.msra.mxu0 0.0
    %1154 = vmatprep.subr.mxu0 0.0
    %1155 = vmatpush1.xpose.msra.mxu0 0.0
    %1156 = vmatprep.subr.mxu0 0.0
    %1157 = vmatpush1.xpose.msra.mxu0 0.0
    %1158 = vmatprep.subr.mxu0 0.0
    %1159 = vmatpush1.xpose.msra.mxu0 0.0
    %1160 = vmatprep.subr.mxu0 0.0
    %1161 = vmatpush1.xpose.msra.mxu0 0.0
    %1162 = vmatprep.subr.mxu0 0.0
    %1163 = vmatpush1.xpose.msra.mxu0 0.0
    %1164 = vmatprep.subr.mxu0 0.0
    %1165 = vmatpush1.xpose.msra.mxu0 0.0
    %1166 = vmatprep.mubr.f32.mxu0 0.0
    %1167 = vmatmul.mubr.f32.gmra.mrb[0].mxu0 %v1098
    %v1168 = vpop.f32.mrb[0].mxu0
    %v1169 = vadd.f32 %v434, %v1168
    %v1170 = vpop.f32.mrb[0].mxu0
    %1171 = vdwg.mxu0
    %1172 = vrot.lane.b32.xlu0 %v252, 112
    %v1173 = vpop.permute.xlu0 %1172
    %1174 = vrot.lane.b32.xlu0 %v338, 112
    %v1175 = vpop.permute.xlu0 %1174
    %v1176 = vsel %vm441, %v1173, 0
    %v1178 = vsel %vm441, %v1175, 0
    %1180 = vmatprep.subr.mxu0 0.0
    %1181 = vmatpush1.xpose.msra.mxu0 %v1178
    %1182 = vmatprep.subr.mxu0 0.0
    %1183 = vmatpush1.xpose.msra.mxu0 0.0
    %1184 = vmatprep.subr.mxu0 0.0
    %1185 = vmatpush1.xpose.msra.mxu0 0.0
    %1186 = vmatprep.subr.mxu0 0.0
    %1187 = vmatpush1.xpose.msra.mxu0 0.0
    %1188 = vmatprep.subr.mxu0 0.0
    %1189 = vmatpush1.xpose.msra.mxu0 0.0
    %1190 = vmatprep.subr.mxu0 0.0
    %1191 = vmatpush1.xpose.msra.mxu0 0.0
    %1192 = vmatprep.subr.mxu0 0.0
    %1193 = vmatpush1.xpose.msra.mxu0 0.0
    %1194 = vmatprep.subr.mxu0 0.0
    %1195 = vmatpush1.xpose.msra.mxu0 0.0
    %1196 = vmatprep.subr.mxu0 0.0
    %1197 = vmatpush1.xpose.msra.mxu0 0.0
    %1198 = vmatprep.subr.mxu0 0.0
    %1199 = vmatpush1.xpose.msra.mxu0 0.0
    %1200 = vmatprep.subr.mxu0 0.0
    %1201 = vmatpush1.xpose.msra.mxu0 0.0
    %1202 = vmatprep.subr.mxu0 0.0
    %1203 = vmatpush1.xpose.msra.mxu0 0.0
    %1204 = vmatprep.subr.mxu0 0.0
    %1205 = vmatpush1.xpose.msra.mxu0 0.0
    %1206 = vmatprep.subr.mxu0 0.0
    %1207 = vmatpush1.xpose.msra.mxu0 0.0
    %1208 = vmatprep.subr.mxu0 0.0
    %1209 = vmatpush1.xpose.msra.mxu0 0.0
    %1210 = vmatprep.subr.mxu0 0.0
    %1211 = vmatpush1.xpose.msra.mxu0 0.0
    %1212 = vmatprep.subr.mxu0 0.0
    %1213 = vmatpush1.xpose.msra.mxu0 0.0
    %1214 = vmatprep.subr.mxu0 0.0
    %1215 = vmatpush1.xpose.msra.mxu0 0.0
    %1216 = vmatprep.subr.mxu0 0.0
    %1217 = vmatpush1.xpose.msra.mxu0 0.0
    %1218 = vmatprep.subr.mxu0 0.0
    %1219 = vmatpush1.xpose.msra.mxu0 0.0
    %1220 = vmatprep.subr.mxu0 0.0
    %1221 = vmatpush1.xpose.msra.mxu0 0.0
    %1222 = vmatprep.subr.mxu0 0.0
    %1223 = vmatpush1.xpose.msra.mxu0 0.0
    %1224 = vmatprep.subr.mxu0 0.0
    %1225 = vmatpush1.xpose.msra.mxu0 0.0
    %1226 = vmatprep.subr.mxu0 0.0
    %1227 = vmatpush1.xpose.msra.mxu0 0.0
    %1228 = vmatprep.subr.mxu0 0.0
    %1229 = vmatpush1.xpose.msra.mxu0 0.0
    %1230 = vmatprep.subr.mxu0 0.0
    %1231 = vmatpush1.xpose.msra.mxu0 0.0
    %1232 = vmatprep.subr.mxu0 0.0
    %1233 = vmatpush1.xpose.msra.mxu0 0.0
    %1234 = vmatprep.subr.mxu0 0.0
    %1235 = vmatpush1.xpose.msra.mxu0 0.0
    %1236 = vmatprep.subr.mxu0 0.0
    %1237 = vmatpush1.xpose.msra.mxu0 0.0
    %1238 = vmatprep.subr.mxu0 0.0
    %1239 = vmatpush1.xpose.msra.mxu0 0.0
    %1240 = vmatprep.subr.mxu0 0.0
    %1241 = vmatpush1.xpose.msra.mxu0 0.0
    %1242 = vmatprep.subr.mxu0 0.0
    %1243 = vmatpush1.xpose.msra.mxu0 0.0
    %1244 = vmatprep.mubr.f32.mxu0 0.0
    %1245 = vmatmul.mubr.f32.gmra.mrb[0].mxu0 %v1176
    %v1246 = vpop.f32.mrb[0].mxu0
    %v1247 = vadd.f32 %v438, %v1246
    %v1248 = vpop.f32.mrb[0].mxu0
    %1249 = vdwg.mxu0
    %v1250 = vsel %vm441, %v1169, -inf
    %1251 = vmax.xlane.f32.xlu0 %v1250
    %v1252 = vpop.xlane.xlu0 %1251
    %v1253 = vsel %vm441, %v1247, -inf
    %1254 = vmax.xlane.f32.xlu0 %v1253
    %v1255 = vpop.xlane.xlu0 %1254
    %v1256 = vsub.f32 %v1169, %v1252
    %v1257 = vsub.f32 %v1247, %v1255
    %v1258 = vmul.f32 %v1256, 1.442695
    %v1259 = vpow.pop %v1258
    %v1260 = vmul.f32 %v1257, 1.442695
    %v1261 = vpow.pop %v1260
    %v1262 = vsel %vm441, %v1259, 0.0
    %1263 = vadd.xlane.f32.xlu0 %v1262
    %v1264 = vpop.xlane.xlu0 %1263
    %v1265 = vsel %vm441, %v1261, 0.0
    %1266 = vadd.xlane.f32.xlu0 %v1265
    %v1267 = vpop.xlane.xlu0 %1266
    %v1268 = vrcp.pop %v1264
    %v1269 = vrcp.pop %v1267
    %v1270 = vmul.f32 %v1259, %v1268
    %v1271 = vmul.f32 %v1261, %v1269
    %1272 = vrot.lane.b32.xlu0 %v419, 112
    %v1273 = vpop.permute.xlu0 %1272
    %v1276 = vsel %vm441, %v1270, 0
    %1278 = vmatprep.subr.mxu0 0.0
    %1279 = vmatpush1.msra.mxu0 %v1273
    %1280 = vmatprep.subr.mxu0 0.0
    %1281 = vmatpush1.msra.mxu0 0.0
    %1282 = vmatprep.subr.mxu0 0.0
    %1283 = vmatpush1.msra.mxu0 0.0
    %1284 = vmatprep.subr.mxu0 0.0
    %1285 = vmatpush1.msra.mxu0 0.0
    %1286 = vmatprep.subr.mxu0 0.0
    %1287 = vmatpush1.msra.mxu0 0.0
    %1288 = vmatprep.subr.mxu0 0.0
    %1289 = vmatpush1.msra.mxu0 0.0
    %1290 = vmatprep.subr.mxu0 0.0
    %1291 = vmatpush1.msra.mxu0 0.0
    %1292 = vmatprep.subr.mxu0 0.0
    %1293 = vmatpush1.msra.mxu0 0.0
    %1294 = vmatprep.subr.mxu0 0.0
    %1295 = vmatpush1.msra.mxu0 0.0
    %1296 = vmatprep.subr.mxu0 0.0
    %1297 = vmatpush1.msra.mxu0 0.0
    %1298 = vmatprep.subr.mxu0 0.0
    %1299 = vmatpush1.msra.mxu0 0.0
    %1300 = vmatprep.subr.mxu0 0.0
    %1301 = vmatpush1.msra.mxu0 0.0
    %1302 = vmatprep.subr.mxu0 0.0
    %1303 = vmatpush1.msra.mxu0 0.0
    %1304 = vmatprep.subr.mxu0 0.0
    %1305 = vmatpush1.msra.mxu0 0.0
    %1306 = vmatprep.subr.mxu0 0.0
    %1307 = vmatpush1.msra.mxu0 0.0
    %1308 = vmatprep.subr.mxu0 0.0
    %1309 = vmatpush1.msra.mxu0 0.0
    %1310 = vmatprep.subr.mxu0 0.0
    %1311 = vmatpush1.msra.mxu0 0.0
    %1312 = vmatprep.subr.mxu0 0.0
    %1313 = vmatpush1.msra.mxu0 0.0
    %1314 = vmatprep.subr.mxu0 0.0
    %1315 = vmatpush1.msra.mxu0 0.0
    %1316 = vmatprep.subr.mxu0 0.0
    %1317 = vmatpush1.msra.mxu0 0.0
    %1318 = vmatprep.subr.mxu0 0.0
    %1319 = vmatpush1.msra.mxu0 0.0
    %1320 = vmatprep.subr.mxu0 0.0
    %1321 = vmatpush1.msra.mxu0 0.0
    %1322 = vmatprep.subr.mxu0 0.0
    %1323 = vmatpush1.msra.mxu0 0.0
    %1324 = vmatprep.subr.mxu0 0.0
    %1325 = vmatpush1.msra.mxu0 0.0
    %1326 = vmatprep.subr.mxu0 0.0
    %1327 = vmatpush1.msra.mxu0 0.0
    %1328 = vmatprep.subr.mxu0 0.0
    %1329 = vmatpush1.msra.mxu0 0.0
    %1330 = vmatprep.subr.mxu0 0.0
    %1331 = vmatpush1.msra.mxu0 0.0
    %1332 = vmatprep.subr.mxu0 0.0
    %1333 = vmatpush1.msra.mxu0 0.0
    %1334 = vmatprep.subr.mxu0 0.0
    %1335 = vmatpush1.msra.mxu0 0.0
    %1336 = vmatprep.subr.mxu0 0.0
    %1337 = vmatpush1.msra.mxu0 0.0
    %1338 = vmatprep.subr.mxu0 0.0
    %1339 = vmatpush1.msra.mxu0 0.0
    %1340 = vmatprep.subr.mxu0 0.0
    %1341 = vmatpush1.msra.mxu0 0.0
    %1342 = vmatprep.mubr.f32.mxu0 0.0
    %1343 = vmatmul.mubr.f32.gmra.mrb[0].mxu0 %v1276
    %v1344 = vpop.f32.mrb[0].mxu0
    %v1345 = vadd.f32 0.0, %v1344
    %v1346 = vpop.f32.mrb[0].mxu0
    %1347 = vdwg.mxu0
    %1348 = vrot.lane.b32.xlu0 %v424, 112
    %v1349 = vpop.permute.xlu0 %1348
    %v1352 = vsel %vm441, %v1271, 0
    %1354 = vmatprep.subr.mxu0 0.0
    %1355 = vmatpush1.msra.mxu0 %v1349
    %1356 = vmatprep.subr.mxu0 0.0
    %1357 = vmatpush1.msra.mxu0 0.0
    %1358 = vmatprep.subr.mxu0 0.0
    %1359 = vmatpush1.msra.mxu0 0.0
    %1360 = vmatprep.subr.mxu0 0.0
    %1361 = vmatpush1.msra.mxu0 0.0
    %1362 = vmatprep.subr.mxu0 0.0
    %1363 = vmatpush1.msra.mxu0 0.0
    %1364 = vmatprep.subr.mxu0 0.0
    %1365 = vmatpush1.msra.mxu0 0.0
    %1366 = vmatprep.subr.mxu0 0.0
    %1367 = vmatpush1.msra.mxu0 0.0
    %1368 = vmatprep.subr.mxu0 0.0
    %1369 = vmatpush1.msra.mxu0 0.0
    %1370 = vmatprep.subr.mxu0 0.0
    %1371 = vmatpush1.msra.mxu0 0.0
    %1372 = vmatprep.subr.mxu0 0.0
    %1373 = vmatpush1.msra.mxu0 0.0
    %1374 = vmatprep.subr.mxu0 0.0
    %1375 = vmatpush1.msra.mxu0 0.0
    %1376 = vmatprep.subr.mxu0 0.0
    %1377 = vmatpush1.msra.mxu0 0.0
    %1378 = vmatprep.subr.mxu0 0.0
    %1379 = vmatpush1.msra.mxu0 0.0
    %1380 = vmatprep.subr.mxu0 0.0
    %1381 = vmatpush1.msra.mxu0 0.0
    %1382 = vmatprep.subr.mxu0 0.0
    %1383 = vmatpush1.msra.mxu0 0.0
    %1384 = vmatprep.subr.mxu0 0.0
    %1385 = vmatpush1.msra.mxu0 0.0
    %1386 = vmatprep.subr.mxu0 0.0
    %1387 = vmatpush1.msra.mxu0 0.0
    %1388 = vmatprep.subr.mxu0 0.0
    %1389 = vmatpush1.msra.mxu0 0.0
    %1390 = vmatprep.subr.mxu0 0.0
    %1391 = vmatpush1.msra.mxu0 0.0
    %1392 = vmatprep.subr.mxu0 0.0
    %1393 = vmatpush1.msra.mxu0 0.0
    %1394 = vmatprep.subr.mxu0 0.0
    %1395 = vmatpush1.msra.mxu0 0.0
    %1396 = vmatprep.subr.mxu0 0.0
    %1397 = vmatpush1.msra.mxu0 0.0
    %1398 = vmatprep.subr.mxu0 0.0
    %1399 = vmatpush1.msra.mxu0 0.0
    %1400 = vmatprep.subr.mxu0 0.0
    %1401 = vmatpush1.msra.mxu0 0.0
    %1402 = vmatprep.subr.mxu0 0.0
    %1403 = vmatpush1.msra.mxu0 0.0
    %1404 = vmatprep.subr.mxu0 0.0
    %1405 = vmatpush1.msra.mxu0 0.0
    %1406 = vmatprep.subr.mxu0 0.0
    %1407 = vmatpush1.msra.mxu0 0.0
    %1408 = vmatprep.subr.mxu0 0.0
    %1409 = vmatpush1.msra.mxu0 0.0
    %1410 = vmatprep.subr.mxu0 0.0
    %1411 = vmatpush1.msra.mxu0 0.0
    %1412 = vmatprep.subr.mxu0 0.0
    %1413 = vmatpush1.msra.mxu0 0.0
    %1414 = vmatprep.subr.mxu0 0.0
    %1415 = vmatpush1.msra.mxu0 0.0
    %1416 = vmatprep.subr.mxu0 0.0
    %1417 = vmatpush1.msra.mxu0 0.0
    %1418 = vmatprep.mubr.f32.mxu0 0.0
    %1419 = vmatmul.mubr.f32.gmra.mrb[0].mxu0 %v1352
    %v1420 = vpop.f32.mrb[0].mxu0
    %v1421 = vadd.f32 0.0, %v1420
    %v1422 = vpop.f32.mrb[0].mxu0
    %1423 = vdwg.mxu0
    %1424 = vrot.lane.b32.xlu0 %v247, 104
    %v1425 = vpop.permute.xlu0 %1424
    %1426 = vrot.lane.b32.xlu0 %v333, 104
    %v1427 = vpop.permute.xlu0 %1426
    %v1428 = vsel %vm441, %v1425, 0
    %v1430 = vsel %vm441, %v1427, 0
    %1432 = vmatprep.subr.mxu0 0.0
    %1433 = vmatpush1.xpose.msra.mxu0 %v1430
    %1434 = vmatprep.subr.mxu0 0.0
    %1435 = vmatpush1.xpose.msra.mxu0 0.0
    %1436 = vmatprep.subr.mxu0 0.0
    %1437 = vmatpush1.xpose.msra.mxu0 0.0
    %1438 = vmatprep.subr.mxu0 0.0
    %1439 = vmatpush1.xpose.msra.mxu0 0.0
    %1440 = vmatprep.subr.mxu0 0.0
    %1441 = vmatpush1.xpose.msra.mxu0 0.0
    %1442 = vmatprep.subr.mxu0 0.0
    %1443 = vmatpush1.xpose.msra.mxu0 0.0
    %1444 = vmatprep.subr.mxu0 0.0
    %1445 = vmatpush1.xpose.msra.mxu0 0.0
    %1446 = vmatprep.subr.mxu0 0.0
    %1447 = vmatpush1.xpose.msra.mxu0 0.0
    %1448 = vmatprep.subr.mxu0 0.0
    %1449 = vmatpush1.xpose.msra.mxu0 0.0
    %1450 = vmatprep.subr.mxu0 0.0
    %1451 = vmatpush1.xpose.msra.mxu0 0.0
    %1452 = vmatprep.subr.mxu0 0.0
    %1453 = vmatpush1.xpose.msra.mxu0 0.0
    %1454 = vmatprep.subr.mxu0 0.0
    %1455 = vmatpush1.xpose.msra.mxu0 0.0
    %1456 = vmatprep.subr.mxu0 0.0
    %1457 = vmatpush1.xpose.msra.mxu0 0.0
    %1458 = vmatprep.subr.mxu0 0.0
    %1459 = vmatpush1.xpose.msra.mxu0 0.0
    %1460 = vmatprep.subr.mxu0 0.0
    %1461 = vmatpush1.xpose.msra.mxu0 0.0
    %1462 = vmatprep.subr.mxu0 0.0
    %1463 = vmatpush1.xpose.msra.mxu0 0.0
    %1464 = vmatprep.subr.mxu0 0.0
    %1465 = vmatpush1.xpose.msra.mxu0 0.0
    %1466 = vmatprep.subr.mxu0 0.0
    %1467 = vmatpush1.xpose.msra.mxu0 0.0
    %1468 = vmatprep.subr.mxu0 0.0
    %1469 = vmatpush1.xpose.msra.mxu0 0.0
    %1470 = vmatprep.subr.mxu0 0.0
    %1471 = vmatpush1.xpose.msra.mxu0 0.0
    %1472 = vmatprep.subr.mxu0 0.0
    %1473 = vmatpush1.xpose.msra.mxu0 0.0
    %1474 = vmatprep.subr.mxu0 0.0
    %1475 = vmatpush1.xpose.msra.mxu0 0.0
    %1476 = vmatprep.subr.mxu0 0.0
    %1477 = vmatpush1.xpose.msra.mxu0 0.0
    %1478 = vmatprep.subr.mxu0 0.0
    %1479 = vmatpush1.xpose.msra.mxu0 0.0
    %1480 = vmatprep.subr.mxu0 0.0
    %1481 = vmatpush1.xpose.msra.mxu0 0.0
    %1482 = vmatprep.subr.mxu0 0.0
    %1483 = vmatpush1.xpose.msra.mxu0 0.0
    %1484 = vmatprep.subr.mxu0 0.0
    %1485 = vmatpush1.xpose.msra.mxu0 0.0
    %1486 = vmatprep.subr.mxu0 0.0
    %1487 = vmatpush1.xpose.msra.mxu0 0.0
    %1488 = vmatprep.subr.mxu0 0.0
    %1489 = vmatpush1.xpose.msra.mxu0 0.0
    %1490 = vmatprep.subr.mxu0 0.0
    %1491 = vmatpush1.xpose.msra.mxu0 0.0
    %1492 = vmatprep.subr.mxu0 0.0
    %1493 = vmatpush1.xpose.msra.mxu0 0.0
    %1494 = vmatprep.subr.mxu0 0.0
    %1495 = vmatpush1.xpose.msra.mxu0 0.0
    %1496 = vmatprep.mubr.f32.mxu0 0.0
    %1497 = vmatmul.mubr.f32.gmra.mrb[0].mxu0 %v1428
    %v1498 = vpop.f32.mrb[0].mxu0
    %v1499 = vadd.f32 %v434, %v1498
    %v1500 = vpop.f32.mrb[0].mxu0
    %1501 = vdwg.mxu0
    %1502 = vrot.lane.b32.xlu0 %v252, 104
    %v1503 = vpop.permute.xlu0 %1502
    %1504 = vrot.lane.b32.xlu0 %v338, 104
    %v1505 = vpop.permute.xlu0 %1504
    %v1506 = vsel %vm441, %v1503, 0
    %v1508 = vsel %vm441, %v1505, 0
    %1510 = vmatprep.subr.mxu0 0.0
    %1511 = vmatpush1.xpose.msra.mxu0 %v1508
    %1512 = vmatprep.subr.mxu0 0.0
    %1513 = vmatpush1.xpose.msra.mxu0 0.0
    %1514 = vmatprep.subr.mxu0 0.0
    %1515 = vmatpush1.xpose.msra.mxu0 0.0
    %1516 = vmatprep.subr.mxu0 0.0
    %1517 = vmatpush1.xpose.msra.mxu0 0.0
    %1518 = vmatprep.subr.mxu0 0.0
    %1519 = vmatpush1.xpose.msra.mxu0 0.0
    %1520 = vmatprep.subr.mxu0 0.0
    %1521 = vmatpush1.xpose.msra.mxu0 0.0
    %1522 = vmatprep.subr.mxu0 0.0
    %1523 = vmatpush1.xpose.msra.mxu0 0.0
    %1524 = vmatprep.subr.mxu0 0.0
    %1525 = vmatpush1.xpose.msra.mxu0 0.0
    %1526 = vmatprep.subr.mxu0 0.0
    %1527 = vmatpush1.xpose.msra.mxu0 0.0
    %1528 = vmatprep.subr.mxu0 0.0
    %1529 = vmatpush1.xpose.msra.mxu0 0.0
    %1530 = vmatprep.subr.mxu0 0.0
    %1531 = vmatpush1.xpose.msra.mxu0 0.0
    %1532 = vmatprep.subr.mxu0 0.0
    %1533 = vmatpush1.xpose.msra.mxu0 0.0
    %1534 = vmatprep.subr.mxu0 0.0
    %1535 = vmatpush1.xpose.msra.mxu0 0.0
    %1536 = vmatprep.subr.mxu0 0.0
    %1537 = vmatpush1.xpose.msra.mxu0 0.0
    %1538 = vmatprep.subr.mxu0 0.0
    %1539 = vmatpush1.xpose.msra.mxu0 0.0
    %1540 = vmatprep.subr.mxu0 0.0
    %1541 = vmatpush1.xpose.msra.mxu0 0.0
    %1542 = vmatprep.subr.mxu0 0.0
    %1543 = vmatpush1.xpose.msra.mxu0 0.0
    %1544 = vmatprep.subr.mxu0 0.0
    %1545 = vmatpush1.xpose.msra.mxu0 0.0
    %1546 = vmatprep.subr.mxu0 0.0
    %1547 = vmatpush1.xpose.msra.mxu0 0.0
    %1548 = vmatprep.subr.mxu0 0.0
    %1549 = vmatpush1.xpose.msra.mxu0 0.0
    %1550 = vmatprep.subr.mxu0 0.0
    %1551 = vmatpush1.xpose.msra.mxu0 0.0
    %1552 = vmatprep.subr.mxu0 0.0
    %1553 = vmatpush1.xpose.msra.mxu0 0.0
    %1554 = vmatprep.subr.mxu0 0.0
    %1555 = vmatpush1.xpose.msra.mxu0 0.0
    %1556 = vmatprep.subr.mxu0 0.0
    %1557 = vmatpush1.xpose.msra.mxu0 0.0
    %1558 = vmatprep.subr.mxu0 0.0
    %1559 = vmatpush1.xpose.msra.mxu0 0.0
    %1560 = vmatprep.subr.mxu0 0.0
    %1561 = vmatpush1.xpose.msra.mxu0 0.0
    %1562 = vmatprep.subr.mxu0 0.0
    %1563 = vmatpush1.xpose.msra.mxu0 0.0
    %1564 = vmatprep.subr.mxu0 0.0
    %1565 = vmatpush1.xpose.msra.mxu0 0.0
    %1566 = vmatprep.subr.mxu0 0.0
    %1567 = vmatpush1.xpose.msra.mxu0 0.0
    %1568 = vmatprep.subr.mxu0 0.0
    %1569 = vmatpush1.xpose.msra.mxu0 0.0
    %1570 = vmatprep.subr.mxu0 0.0
    %1571 = vmatpush1.xpose.msra.mxu0 0.0
    %1572 = vmatprep.subr.mxu0 0.0
    %1573 = vmatpush1.xpose.msra.mxu0 0.0
    %1574 = vmatprep.mubr.f32.mxu0 0.0
    %1575 = vmatmul.mubr.f32.gmra.mrb[0].mxu0 %v1506
    %v1576 = vpop.f32.mrb[0].mxu0
    %v1577 = vadd.f32 %v438, %v1576
    %v1578 = vpop.f32.mrb[0].mxu0
    %1579 = vdwg.mxu0
    %v1580 = vsel %vm441, %v1499, -inf
    %1581 = vmax.xlane.f32.xlu0 %v1580
    %v1582 = vpop.xlane.xlu0 %1581
    %v1583 = vsel %vm441, %v1577, -inf
    %1584 = vmax.xlane.f32.xlu0 %v1583
    %v1585 = vpop.xlane.xlu0 %1584
    %v1586 = vsub.f32 %v1499, %v1582
    %v1587 = vsub.f32 %v1577, %v1585
    %v1588 = vmul.f32 %v1586, 1.442695
    %v1589 = vpow.pop %v1588
    %v1590 = vmul.f32 %v1587, 1.442695
    %v1591 = vpow.pop %v1590
    %v1592 = vsel %vm441, %v1589, 0.0
    %1593 = vadd.xlane.f32.xlu0 %v1592
    %v1594 = vpop.xlane.xlu0 %1593
    %v1595 = vsel %vm441, %v1591, 0.0
    %1596 = vadd.xlane.f32.xlu0 %v1595
    %v1597 = vpop.xlane.xlu0 %1596
    %v1598 = vrcp.pop %v1594
    %v1599 = vrcp.pop %v1597
    %v1600 = vmul.f32 %v1589, %v1598
    %v1601 = vmul.f32 %v1591, %v1599
    %1602 = vrot.lane.b32.xlu0 %v419, 104
    %v1603 = vpop.permute.xlu0 %1602
    %v1606 = vsel %vm441, %v1600, 0
    %1608 = vmatprep.subr.mxu0 0.0
    %1609 = vmatpush1.msra.mxu0 %v1603
    %1610 = vmatprep.subr.mxu0 0.0
    %1611 = vmatpush1.msra.mxu0 0.0
    %1612 = vmatprep.subr.mxu0 0.0
    %1613 = vmatpush1.msra.mxu0 0.0
    %1614 = vmatprep.subr.mxu0 0.0
    %1615 = vmatpush1.msra.mxu0 0.0
    %1616 = vmatprep.subr.mxu0 0.0
    %1617 = vmatpush1.msra.mxu0 0.0
    %1618 = vmatprep.subr.mxu0 0.0
    %1619 = vmatpush1.msra.mxu0 0.0
    %1620 = vmatprep.subr.mxu0 0.0
    %1621 = vmatpush1.msra.mxu0 0.0
    %1622 = vmatprep.subr.mxu0 0.0
    %1623 = vmatpush1.msra.mxu0 0.0
    %1624 = vmatprep.subr.mxu0 0.0
    %1625 = vmatpush1.msra.mxu0 0.0
    %1626 = vmatprep.subr.mxu0 0.0
    %1627 = vmatpush1.msra.mxu0 0.0
    %1628 = vmatprep.subr.mxu0 0.0
    %1629 = vmatpush1.msra.mxu0 0.0
    %1630 = vmatprep.subr.mxu0 0.0
    %1631 = vmatpush1.msra.mxu0 0.0
    %1632 = vmatprep.subr.mxu0 0.0
    %1633 = vmatpush1.msra.mxu0 0.0
    %1634 = vmatprep.subr.mxu0 0.0
    %1635 = vmatpush1.msra.mxu0 0.0
    %1636 = vmatprep.subr.mxu0 0.0
    %1637 = vmatpush1.msra.mxu0 0.0
    %1638 = vmatprep.subr.mxu0 0.0
    %1639 = vmatpush1.msra.mxu0 0.0
    %1640 = vmatprep.subr.mxu0 0.0
    %1641 = vmatpush1.msra.mxu0 0.0
    %1642 = vmatprep.subr.mxu0 0.0
    %1643 = vmatpush1.msra.mxu0 0.0
    %1644 = vmatprep.subr.mxu0 0.0
    %1645 = vmatpush1.msra.mxu0 0.0
    %1646 = vmatprep.subr.mxu0 0.0
    %1647 = vmatpush1.msra.mxu0 0.0
    %1648 = vmatprep.subr.mxu0 0.0
    %1649 = vmatpush1.msra.mxu0 0.0
    %1650 = vmatprep.subr.mxu0 0.0
    %1651 = vmatpush1.msra.mxu0 0.0
    %1652 = vmatprep.subr.mxu0 0.0
    %1653 = vmatpush1.msra.mxu0 0.0
    %1654 = vmatprep.subr.mxu0 0.0
    %1655 = vmatpush1.msra.mxu0 0.0
    %1656 = vmatprep.subr.mxu0 0.0
    %1657 = vmatpush1.msra.mxu0 0.0
    %1658 = vmatprep.subr.mxu0 0.0
    %1659 = vmatpush1.msra.mxu0 0.0
    %1660 = vmatprep.subr.mxu0 0.0
    %1661 = vmatpush1.msra.mxu0 0.0
    %1662 = vmatprep.subr.mxu0 0.0
    %1663 = vmatpush1.msra.mxu0 0.0
    %1664 = vmatprep.subr.mxu0 0.0
    %1665 = vmatpush1.msra.mxu0 0.0
    %1666 = vmatprep.subr.mxu0 0.0
    %1667 = vmatpush1.msra.mxu0 0.0
    %1668 = vmatprep.subr.mxu0 0.0
    %1669 = vmatpush1.msra.mxu0 0.0
    %1670 = vmatprep.subr.mxu0 0.0
    %1671 = vmatpush1.msra.mxu0 0.0
    %1672 = vmatprep.mubr.f32.mxu0 0.0
    %1673 = vmatmul.mubr.f32.gmra.mrb[0].mxu0 %v1606
    %v1674 = vpop.f32.mrb[0].mxu0
    %v1675 = vadd.f32 0.0, %v1674
    %v1676 = vpop.f32.mrb[0].mxu0
    %1677 = vdwg.mxu0
    %1678 = vrot.lane.b32.xlu0 %v424, 104
    %v1679 = vpop.permute.xlu0 %1678
    %v1682 = vsel %vm441, %v1601, 0
    %1684 = vmatprep.subr.mxu0 0.0
    %1685 = vmatpush1.msra.mxu0 %v1679
    %1686 = vmatprep.subr.mxu0 0.0
    %1687 = vmatpush1.msra.mxu0 0.0
    %1688 = vmatprep.subr.mxu0 0.0
    %1689 = vmatpush1.msra.mxu0 0.0
    %1690 = vmatprep.subr.mxu0 0.0
    %1691 = vmatpush1.msra.mxu0 0.0
    %1692 = vmatprep.subr.mxu0 0.0
    %1693 = vmatpush1.msra.mxu0 0.0
    %1694 = vmatprep.subr.mxu0 0.0
    %1695 = vmatpush1.msra.mxu0 0.0
    %1696 = vmatprep.subr.mxu0 0.0
    %1697 = vmatpush1.msra.mxu0 0.0
    %1698 = vmatprep.subr.mxu0 0.0
    %1699 = vmatpush1.msra.mxu0 0.0
    %1700 = vmatprep.subr.mxu0 0.0
    %1701 = vmatpush1.msra.mxu0 0.0
    %1702 = vmatprep.subr.mxu0 0.0
    %1703 = vmatpush1.msra.mxu0 0.0
    %1704 = vmatprep.subr.mxu0 0.0
    %1705 = vmatpush1.msra.mxu0 0.0
    %1706 = vmatprep.subr.mxu0 0.0
    %1707 = vmatpush1.msra.mxu0 0.0
    %1708 = vmatprep.subr.mxu0 0.0
    %1709 = vmatpush1.msra.mxu0 0.0
    %1710 = vmatprep.subr.mxu0 0.0
    %1711 = vmatpush1.msra.mxu0 0.0
    %1712 = vmatprep.subr.mxu0 0.0
    %1713 = vmatpush1.msra.mxu0 0.0
    %1714 = vmatprep.subr.mxu0 0.0
    %1715 = vmatpush1.msra.mxu0 0.0
    %1716 = vmatprep.subr.mxu0 0.0
    %1717 = vmatpush1.msra.mxu0 0.0
    %1718 = vmatprep.subr.mxu0 0.0
    %1719 = vmatpush1.msra.mxu0 0.0
    %1720 = vmatprep.subr.mxu0 0.0
    %1721 = vmatpush1.msra.mxu0 0.0
    %1722 = vmatprep.subr.mxu0 0.0
    %1723 = vmatpush1.msra.mxu0 0.0
    %1724 = vmatprep.subr.mxu0 0.0
    %1725 = vmatpush1.msra.mxu0 0.0
    %1726 = vmatprep.subr.mxu0 0.0
    %1727 = vmatpush1.msra.mxu0 0.0
    %1728 = vmatprep.subr.mxu0 0.0
    %1729 = vmatpush1.msra.mxu0 0.0
    %1730 = vmatprep.subr.mxu0 0.0
    %1731 = vmatpush1.msra.mxu0 0.0
    %1732 = vmatprep.subr.mxu0 0.0
    %1733 = vmatpush1.msra.mxu0 0.0
    %1734 = vmatprep.subr.mxu0 0.0
    %1735 = vmatpush1.msra.mxu0 0.0
    %1736 = vmatprep.subr.mxu0 0.0
    %1737 = vmatpush1.msra.mxu0 0.0
    %1738 = vmatprep.subr.mxu0 0.0
    %1739 = vmatpush1.msra.mxu0 0.0
    %1740 = vmatprep.subr.mxu0 0.0
    %1741 = vmatpush1.msra.mxu0 0.0
    %1742 = vmatprep.subr.mxu0 0.0
    %1743 = vmatpush1.msra.mxu0 0.0
    %1744 = vmatprep.subr.mxu0 0.0
    %1745 = vmatpush1.msra.mxu0 0.0
    %1746 = vmatprep.subr.mxu0 0.0
    %1747 = vmatpush1.msra.mxu0 0.0
    %1748 = vmatprep.mubr.f32.mxu0 0.0
    %1749 = vmatmul.mubr.f32.gmra.mrb[0].mxu0 %v1682
    %v1750 = vpop.f32.mrb[0].mxu0
    %v1751 = vadd.f32 0.0, %v1750
    %v1752 = vpop.f32.mrb[0].mxu0
    %1753 = vdwg.mxu0
    %1756 = vrot.lane.b32.xlu0 %v1014, 8
    %v1757 = vpop.permute.xlu0 %1756
    %1758 = vrot.lane.b32.xlu0 %v1091, 8
    %v1759 = vpop.permute.xlu0 %1758
    %1764 = vrot.lane.b32.xlu0 %v1345, 16
    %v1765 = vpop.permute.xlu0 %1764
    %1766 = vrot.lane.b32.xlu0 %v1421, 16
    %v1767 = vpop.permute.xlu0 %1766
    %1772 = vrot.lane.b32.xlu0 %v1675, 24
    %v1773 = vpop.permute.xlu0 %1772
    %1774 = vrot.lane.b32.xlu0 %v1751, 24
    %v1775 = vpop.permute.xlu0 %1774
    %v1778 = vsel %vm441, %v686, %v1757
    %v1779 = vsel %vm441, %v759, %v1759
    %vm1780 = vcmask 130048
    %v1781 = vsel %vm1780, %v1778, %v1765
    %v1782 = vsel %vm1780, %v1779, %v1767
    %vm1783 = vcmask 195584
    %v1784 = vsel %vm1783, %v1781, %v1773
    %v1785 = vsel %vm1783, %v1782, %v1775
    %v1786 = vld [vmem:[#allocation5] sm:$0xff]
    %v1787 = vld [vmem:[#allocation5 + $0x8] sm:$0xff]
    %v1788 = vld [vmem:[#allocation5 + $0x10] sm:$0xff]
    %v1789 = vld [vmem:[#allocation5 + $0x18] sm:$0xff]
    %v1790 = vld [vmem:[%s11] sm:$0x1]
    %v1792 = vlaneseq
    %v1793 = vshrl.u32 %v1792, 7
    %v1794 = vsub.s32 0, %v1793
    %v1795 = vrot.slane %v1790, %v1794
    %v1798 = vsel %vm105, %v1784, 0
    %v1801 = vsel %vm105, %v1785, 0
    %1803 = vmatprep.subr.mxu0 0.0
    %1804 = vmatpush1.msra.mxu0 %v1786
    %1805 = vmatprep.subr.mxu0 0.0
    %1806 = vmatpush1.msra.mxu0 %v1787
    %1807 = vmatprep.subr.mxu0 0.0
    %1808 = vmatpush1.msra.mxu0 %v1788
    %1809 = vmatprep.subr.mxu0 0.0
    %1810 = vmatpush1.msra.mxu0 %v1789
    %1811 = vmatprep.subr.mxu0 0.0
    %1812 = vmatpush1.msra.mxu0 0.0
    %1813 = vmatprep.subr.mxu0 0.0
    %1814 = vmatpush1.msra.mxu0 0.0
    %1815 = vmatprep.subr.mxu0 0.0
    %1816 = vmatpush1.msra.mxu0 0.0
    %1817 = vmatprep.subr.mxu0 0.0
    %1818 = vmatpush1.msra.mxu0 0.0
    %1819 = vmatprep.subr.mxu0 0.0
    %1820 = vmatpush1.msra.mxu0 0.0
    %1821 = vmatprep.subr.mxu0 0.0
    %1822 = vmatpush1.msra.mxu0 0.0
    %1823 = vmatprep.subr.mxu0 0.0
    %1824 = vmatpush1.msra.mxu0 0.0
    %1825 = vmatprep.subr.mxu0 0.0
    %1826 = vmatpush1.msra.mxu0 0.0
    %1827 = vmatprep.subr.mxu0 0.0
    %1828 = vmatpush1.msra.mxu0 0.0
    %1829 = vmatprep.subr.mxu0 0.0
    %1830 = vmatpush1.msra.mxu0 0.0
    %1831 = vmatprep.subr.mxu0 0.0
    %1832 = vmatpush1.msra.mxu0 0.0
    %1833 = vmatprep.subr.mxu0 0.0
    %1834 = vmatpush1.msra.mxu0 0.0
    %1835 = vmatprep.subr.mxu0 0.0
    %1836 = vmatpush1.msra.mxu0 0.0
    %1837 = vmatprep.subr.mxu0 0.0
    %1838 = vmatpush1.msra.mxu0 0.0
    %1839 = vmatprep.subr.mxu0 0.0
    %1840 = vmatpush1.msra.mxu0 0.0
    %1841 = vmatprep.subr.mxu0 0.0
    %1842 = vmatpush1.msra.mxu0 0.0
    %1843 = vmatprep.subr.mxu0 0.0
    %1844 = vmatpush1.msra.mxu0 0.0
    %1845 = vmatprep.subr.mxu0 0.0
    %1846 = vmatpush1.msra.mxu0 0.0
    %1847 = vmatprep.subr.mxu0 0.0
    %1848 = vmatpush1.msra.mxu0 0.0
    %1849 = vmatprep.subr.mxu0 0.0
    %1850 = vmatpush1.msra.mxu0 0.0
    %1851 = vmatprep.subr.mxu0 0.0
    %1852 = vmatpush1.msra.mxu0 0.0
    %1853 = vmatprep.subr.mxu0 0.0
    %1854 = vmatpush1.msra.mxu0 0.0
    %1855 = vmatprep.subr.mxu0 0.0
    %1856 = vmatpush1.msra.mxu0 0.0
    %1857 = vmatprep.subr.mxu0 0.0
    %1858 = vmatpush1.msra.mxu0 0.0
    %1859 = vmatprep.subr.mxu0 0.0
    %1860 = vmatpush1.msra.mxu0 0.0
    %1861 = vmatprep.subr.mxu0 0.0
    %1862 = vmatpush1.msra.mxu0 0.0
    %1863 = vmatprep.subr.mxu0 0.0
    %1864 = vmatpush1.msra.mxu0 0.0
    %1865 = vmatprep.subr.mxu0 0.0
    %1866 = vmatpush1.msra.mxu0 0.0
    %1867 = vmatprep.mubr.f32.mxu0 0.0
    %1868 = vmatmul.mubr.f32.gmra.mrb[0].mxu0 %v1798
    %v1869 = vpop.f32.mrb[0].mxu0
    %v1870 = vadd.f32 %v1795, %v1869
    %v1871 = vpop.f32.mrb[0].mxu0
    %1872 = vmatprep.mubr.f32.mxu0 0.0
    %1873 = vmatmul.mubr.f32.gmra.mrb[0].mxu0 %v1801
    %v1874 = vpop.f32.mrb[0].mxu0
    %v1875 = vadd.f32 %v1795, %v1874
    %v1876 = vpop.f32.mrb[0].mxu0
    %1877 = vdwg.mxu0
    %v1878 = vadd.f32 %v101, %v1870
    %v1879 = vadd.f32 %v102, %v1875
    %v1880 = vld [vmem:[%s12] sm:$0x1]
    %v1881 = vld [vmem:[%s13] sm:$0x1]
    %v1882 = vsel %vm105, %v1878, 0.0
    %1883 = vadd.xlane.f32.xlu0 %v1882
    %v1884 = vpop.xlane.xlu0 %1883
    %v1885 = vsel %vm105, %v1879, 0.0
    %1886 = vadd.xlane.f32.xlu0 %v1885
    %v1887 = vpop.xlane.xlu0 %1886
    %v1888 = vmul.f32 %v1884, %v112
    %v1889 = vmul.f32 %v1887, %v112
    %v1890 = vsub.f32 %v1878, %v1888
    %v1891 = vsub.f32 %v1879, %v1889
    %v1892 = vmul.f32 %v1890, %v1890
    %v1893 = vmul.f32 %v1891, %v1891
    %v1894 = vsel %vm105, %v1892, 0.0
    %1895 = vadd.xlane.f32.xlu0 %v1894
    %v1896 = vpop.xlane.xlu0 %1895
    %v1897 = vsel %vm105, %v1893, 0.0
    %1898 = vadd.xlane.f32.xlu0 %v1897
    %v1899 = vpop.xlane.xlu0 %1898
    %v1900 = vmul.f32 %v1896, 0.032258064
    %v1901 = vmul.f32 %v1899, 0.032258064
    %v1902 = vrsqrt.pop %v1900
    %v1903 = vmul.f32 %v1900, %v1902
    %vm1904 = vcmp.eq.f32.partialorder %v1900, inf
    %v1905 = vsel %vm1904, %v1900, %v1903
    %vm1906 = vcmp.eq.f32.partialorder %v1900, 0.0
    %v1907 = vand.u32 %v1900, 2147483648
    %v1908 = vsel %vm1906, %v1907, %v1905
    %v1909 = vrsqrt.pop %v1901
    %v1910 = vmul.f32 %v1901, %v1909
    %vm1911 = vcmp.eq.f32.partialorder %v1901, inf
    %v1912 = vsel %vm1911, %v1901, %v1910
    %vm1913 = vcmp.eq.f32.partialorder %v1901, 0.0
    %v1914 = vand.u32 %v1901, 2147483648
    %v1915 = vsel %vm1913, %v1914, %v1912
    %v1916 = vadd.f32 %v1908, 1e-06
    %v1917 = vadd.f32 %v1915, 1e-06
    %v1918 = vrcp.pop %v1916
    %v1919 = vrcp.pop %v1917
    %v1921 = vlaneseq
    %v1922 = vshrl.u32 %v1921, 7
    %v1923 = vsub.s32 0, %v1922
    %v1924 = vrot.slane %v1880, %v1923
    %v1926 = vmul.f32 %v1924, %v1890
    %v1927 = vmul.f32 %v1924, %v1891
    %v1928 = vmul.f32 %v1926, %v1918
    %v1929 = vmul.f32 %v1927, %v1919
    %v1931 = vlaneseq
    %v1932 = vshrl.u32 %v1931, 7
    %v1933 = vsub.s32 0, %v1932
    %v1934 = vrot.slane %v1881, %v1933
    %v1936 = vadd.f32 %v1928, %v1934
    %v1937 = vadd.f32 %v1929, %v1934
    %v1938 = vld [vmem:[#allocation7] sm:$0xff]
    %v1939 = vld [vmem:[#allocation7 + $0x8] sm:$0xff]
    %v1940 = vld [vmem:[#allocation7 + $0x10] sm:$0xff]
    %v1941 = vld [vmem:[#allocation7 + $0x18] sm:$0xff]
    %v1942 = vld [vmem:[%s15] sm:$0x1]
    %v1944 = vlaneseq
    %v1945 = vshrl.u32 %v1944, 7
    %v1946 = vsub.s32 0, %v1945
    %v1947 = vrot.slane %v1942, %v1946
    %v1950 = vsel %vm105, %v1936, 0
    %v1953 = vsel %vm105, %v1937, 0
    %1955 = vmatprep.subr.mxu0 0.0
    %1956 = vmatpush1.msra.mxu0 %v1938
    %1957 = vmatprep.subr.mxu0 0.0
    %1958 = vmatpush1.msra.mxu0 %v1939
    %1959 = vmatprep.subr.mxu0 0.0
    %1960 = vmatpush1.msra.mxu0 %v1940
    %1961 = vmatprep.subr.mxu0 0.0
    %1962 = vmatpush1.msra.mxu0 %v1941
    %1963 = vmatprep.subr.mxu0 0.0
    %1964 = vmatpush1.msra.mxu0 0.0
    %1965 = vmatprep.subr.mxu0 0.0
    %1966 = vmatpush1.msra.mxu0 0.0
    %1967 = vmatprep.subr.mxu0 0.0
    %1968 = vmatpush1.msra.mxu0 0.0
    %1969 = vmatprep.subr.mxu0 0.0
    %1970 = vmatpush1.msra.mxu0 0.0
    %1971 = vmatprep.subr.mxu0 0.0
    %1972 = vmatpush1.msra.mxu0 0.0
    %1973 = vmatprep.subr.mxu0 0.0
    %1974 = vmatpush1.msra.mxu0 0.0
    %1975 = vmatprep.subr.mxu0 0.0
    %1976 = vmatpush1.msra.mxu0 0.0
    %1977 = vmatprep.subr.mxu0 0.0
    %1978 = vmatpush1.msra.mxu0 0.0
    %1979 = vmatprep.subr.mxu0 0.0
    %1980 = vmatpush1.msra.mxu0 0.0
    %1981 = vmatprep.subr.mxu0 0.0
    %1982 = vmatpush1.msra.mxu0 0.0
    %1983 = vmatprep.subr.mxu0 0.0
    %1984 = vmatpush1.msra.mxu0 0.0
    %1985 = vmatprep.subr.mxu0 0.0
    %1986 = vmatpush1.msra.mxu0 0.0
    %1987 = vmatprep.subr.mxu0 0.0
    %1988 = vmatpush1.msra.mxu0 0.0
    %1989 = vmatprep.subr.mxu0 0.0
    %1990 = vmatpush1.msra.mxu0 0.0
    %1991 = vmatprep.subr.mxu0 0.0
    %1992 = vmatpush1.msra.mxu0 0.0
    %1993 = vmatprep.subr.mxu0 0.0
    %1994 = vmatpush1.msra.mxu0 0.0
    %1995 = vmatprep.subr.mxu0 0.0
    %1996 = vmatpush1.msra.mxu0 0.0
    %1997 = vmatprep.subr.mxu0 0.0
    %1998 = vmatpush1.msra.mxu0 0.0
    %1999 = vmatprep.subr.mxu0 0.0
    %2000 = vmatpush1.msra.mxu0 0.0
    %2001 = vmatprep.subr.mxu0 0.0
    %2002 = vmatpush1.msra.mxu0 0.0
    %2003 = vmatprep.subr.mxu0 0.0
    %2004 = vmatpush1.msra.mxu0 0.0
    %2005 = vmatprep.subr.mxu0 0.0
    %2006 = vmatpush1.msra.mxu0 0.0
    %2007 = vmatprep.subr.mxu0 0.0
    %2008 = vmatpush1.msra.mxu0 0.0
    %2009 = vmatprep.subr.mxu0 0.0
    %2010 = vmatpush1.msra.mxu0 0.0
    %2011 = vmatprep.subr.mxu0 0.0
    %2012 = vmatpush1.msra.mxu0 0.0
    %2013 = vmatprep.subr.mxu0 0.0
    %2014 = vmatpush1.msra.mxu0 0.0
    %2015 = vmatprep.subr.mxu0 0.0
    %2016 = vmatpush1.msra.mxu0 0.0
    %2017 = vmatprep.subr.mxu0 0.0
    %2018 = vmatpush1.msra.mxu0 0.0
    %2019 = vmatprep.mubr.f32.mxu0 0.0
    %2020 = vmatmul.mubr.f32.gmra.mrb[0].mxu0 %v1950
    %v2021 = vpop.f32.mrb[0].mxu0
    %v2022 = vadd.f32 %v1947, %v2021
    %v2023 = vpop.f32.mrb[0].mxu0
    %2024 = vmatprep.mubr.f32.mxu0 0.0
    %2025 = vmatmul.mubr.f32.gmra.mrb[0].mxu0 %v1953
    %v2026 = vpop.f32.mrb[0].mxu0
    %v2027 = vadd.f32 %v1947, %v2026
    %v2028 = vpop.f32.mrb[0].mxu0
    %2029 = vdwg.mxu0
    %v2030 = vmax.f32 %v2022, 0.0
    %v2031 = vmax.f32 %v2027, 0.0
    %v2032 = vld [vmem:[%s16] sm:$0xff]
    %v2033 = vld [vmem:[%s16 + $0x8] sm:$0xff]
    %v2034 = vld [vmem:[%s16 + $0x10] sm:$0xff]
    %v2035 = vld [vmem:[%s16 + $0x18] sm:$0xff]
    %v2036 = vld [vmem:[%s16 + $0x20] sm:$0xff]
    %v2037 = vld [vmem:[%s16 + $0x28] sm:$0xff]
    %v2038 = vld [vmem:[%s16 + $0x30] sm:$0xff]
    %v2039 = vld [vmem:[%s16 + $0x38] sm:$0xff]
    %v2040 = vld [vmem:[%s17] sm:$0x1]
    %v2042 = vlaneseq
    %v2043 = vshrl.u32 %v2042, 7
    %v2044 = vsub.s32 0, %v2043
    %v2045 = vrot.slane %v2040, %v2044
    %vm2047 = vcmask 523264
    %v2049 = vsel %vm2047, %v2030, 0
    %v2052 = vsel %vm2047, %v2031, 0
    %2054 = vmatprep.subr.mxu0 0.0
    %2055 = vmatpush1.msra.mxu0 %v2032
    %2056 = vmatprep.subr.mxu0 0.0
    %2057 = vmatpush1.msra.mxu0 %v2033
    %2058 = vmatprep.subr.mxu0 0.0
    %2059 = vmatpush1.msra.mxu0 %v2034
    %2060 = vmatprep.subr.mxu0 0.0
    %2061 = vmatpush1.msra.mxu0 %v2035
    %2062 = vmatprep.subr.mxu0 0.0
    %2063 = vmatpush1.msra.mxu0 %v2036
    %2064 = vmatprep.subr.mxu0 0.0
    %2065 = vmatpush1.msra.mxu0 %v2037
    %2066 = vmatprep.subr.mxu0 0.0
    %2067 = vmatpush1.msra.mxu0 %v2038
    %2068 = vmatprep.subr.mxu0 0.0
    %2069 = vmatpush1.msra.mxu0 %v2039
    %2070 = vmatprep.subr.mxu0 0.0
    %2071 = vmatpush1.msra.mxu0 0.0
    %2072 = vmatprep.subr.mxu0 0.0
    %2073 = vmatpush1.msra.mxu0 0.0
    %2074 = vmatprep.subr.mxu0 0.0
    %2075 = vmatpush1.msra.mxu0 0.0
    %2076 = vmatprep.subr.mxu0 0.0
    %2077 = vmatpush1.msra.mxu0 0.0
    %2078 = vmatprep.subr.mxu0 0.0
    %2079 = vmatpush1.msra.mxu0 0.0
    %2080 = vmatprep.subr.mxu0 0.0
    %2081 = vmatpush1.msra.mxu0 0.0
    %2082 = vmatprep.subr.mxu0 0.0
    %2083 = vmatpush1.msra.mxu0 0.0
    %2084 = vmatprep.subr.mxu0 0.0
    %2085 = vmatpush1.msra.mxu0 0.0
    %2086 = vmatprep.subr.mxu0 0.0
    %2087 = vmatpush1.msra.mxu0 0.0
    %2088 = vmatprep.subr.mxu0 0.0
    %2089 = vmatpush1.msra.mxu0 0.0
    %2090 = vmatprep.subr.mxu0 0.0
    %2091 = vmatpush1.msra.mxu0 0.0
    %2092 = vmatprep.subr.mxu0 0.0
    %2093 = vmatpush1.msra.mxu0 0.0
    %2094 = vmatprep.subr.mxu0 0.0
    %2095 = vmatpush1.msra.mxu0 0.0
    %2096 = vmatprep.subr.mxu0 0.0
    %2097 = vmatpush1.msra.mxu0 0.0
    %2098 = vmatprep.subr.mxu0 0.0
    %2099 = vmatpush1.msra.mxu0 0.0
    %2100 = vmatprep.subr.mxu0 0.0
    %2101 = vmatpush1.msra.mxu0 0.0
    %2102 = vmatprep.subr.mxu0 0.0
    %2103 = vmatpush1.msra.mxu0 0.0
    %2104 = vmatprep.subr.mxu0 0.0
    %2105 = vmatpush1.msra.mxu0 0.0
    %2106 = vmatprep.subr.mxu0 0.0
    %2107 = vmatpush1.msra.mxu0 0.0
    %2108 = vmatprep.subr.mxu0 0.0
    %2109 = vmatpush1.msra.mxu0 0.0
    %2110 = vmatprep.subr.mxu0 0.0
    %2111 = vmatpush1.msra.mxu0 0.0
    %2112 = vmatprep.subr.mxu0 0.0
    %2113 = vmatpush1.msra.mxu0 0.0
    %2114 = vmatprep.subr.mxu0 0.0
    %2115 = vmatpush1.msra.mxu0 0.0
    %2116 = vmatprep.subr.mxu0 0.0
    %2117 = vmatpush1.msra.mxu0 0.0
    %2118 = vmatprep.mubr.f32.mxu0 0.0
    %2119 = vmatmul.mubr.f32.gmra.mrb[0].mxu0 %v2049
    %v2120 = vpop.f32.mrb[0].mxu0
    %v2121 = vadd.f32 %v2045, %v2120
    %v2122 = vpop.f32.mrb[0].mxu0
    %2123 = vmatprep.mubr.f32.mxu0 0.0
    %2124 = vmatmul.mubr.f32.gmra.mrb[0].mxu0 %v2052
    %v2125 = vpop.f32.mrb[0].mxu0
    %v2126 = vadd.f32 %v2045, %v2125
    %v2127 = vpop.f32.mrb[0].mxu0
    %2128 = vdwg.mxu0
    %v2129 = vadd.f32 %v1878, %v2121
    %v2130 = vadd.f32 %v1879, %v2126
    %2131 = vst.msk [vmem:[#allocation8] sm:$0xff] %vm105, %v2129
    %2132 = vst.msk [vmem:[#allocation8 + $0x8] sm:$0xff] %vm105, %v2130
    // Predicated region
    $region86: #{tpu_custom_call.1} parent=1 // pred_check
      _
    $region87: #{tpu_custom_call.1} parent=1 // pred_check_branch
      %2134 = sbr.rel (0) target = $region89
    $region88: #{tpu_custom_call.1} parent=1 // pred_region
      %s2136 = ssub.s32 256, 256
      %2137 = vsyncadd [#allocation4], %s2136
      %s2138 = sshll.u32 [#allocation8], 4
      %s2139 = int_to_ptr.vmem [resolvable:$true] %s2138
      %2144 = dma.vmem_to_hbm [thread:$0]  %s2139, 256, %s18, [#allocation4], 128, 128, 8
    $region89: #{tpu_custom_call.1} parent=1 // pred_fallthru
      _
    // Predicated region
    $region90: #{tpu_custom_call.1} parent=1 // pred_check
      _
    $region91: #{tpu_custom_call.1} parent=1 // pred_check_branch
      %2146 = sbr.rel (0) target = $region93
    $region92: #{tpu_custom_call.1} parent=1 // pred_region
      %2147 = dma.done [#allocation4], 256
    $region93: #{tpu_custom_call.1} parent=1 // pred_fallthru
      _
    %2148 = vsyncpa [#allocation3], 1
    %2149 = vsyncpa [#allocation6], 1
    %2150 = vsyncpa [#allocation4], 1

</llo_original>
